<compile_context>
chip_gen: v7x
topology: tpu7x:2x2x1
jax: 0.10.0
libtpu: 0.0.40
codegen_flags: <defaults>
</compile_context>

<pallas_src>
import numpy as np
import jax
import jax.numpy as jnp
from jax.experimental import pallas as pl
from jax.experimental.pallas import tpu as pltpu

N_QUBITS = 8
DIM = 2 ** N_QUBITS            # 256
NUM_PARAMS_CONV = 15
N_LAYERS = 5
LATENT_DIM = 9

# bf16 A + bf16 psi at the MXU (f32 accumulation).  Set to jnp.float32 for a
# tighter numerical match (then the test tolerance drops to 2e-3).
A_DTYPE = jnp.bfloat16

# ----------------------------------------------------------------------------
# Host-side (NumPy, float64/complex128) circuit construction: gates, unitary U,
# observables O_k, and the folded real matrices A_k = Re(U^dag O_k U).
# ----------------------------------------------------------------------------
_I2 = np.eye(2, dtype=np.complex128)
_X = np.array([[0, 1], [1, 0]], dtype=np.complex128)
_Y = np.array([[0, -1j], [1j, 0]], dtype=np.complex128)
_Z = np.array([[1, 0], [0, -1]], dtype=np.complex128)
_CNOT = np.array([[1, 0, 0, 0],
                  [0, 1, 0, 0],
                  [0, 0, 0, 1],
                  [0, 0, 1, 0]], dtype=np.complex128)


def _u3(theta, phi, lam):
    ct, st = np.cos(theta / 2.0), np.sin(theta / 2.0)
    return np.array(
        [[ct, -np.exp(1j * lam) * st],
         [np.exp(1j * phi) * st, np.exp(1j * (phi + lam)) * ct]],
        dtype=np.complex128)


def _ry(theta):
    c, s = np.cos(theta / 2.0), np.sin(theta / 2.0)
    return np.array([[c, -s], [s, c]], dtype=np.complex128)


def _rz(theta):
    return np.array([[np.exp(-0.5j * theta), 0.0],
                     [0.0, np.exp(0.5j * theta)]], dtype=np.complex128)


def _apply_1q(state, gate, wire):
    state = np.tensordot(gate, state, axes=([1], [wire]))
    return np.moveaxis(state, 0, wire)


def _apply_2q(state, gate, w0, w1):
    g = gate.reshape(2, 2, 2, 2)  # [out0, out1, in0, in1]
    state = np.tensordot(g, state, axes=([2, 3], [w0, w1]))
    return np.moveaxis(state, [0, 1], [w0, w1])


def _u_su4(state, p, wires):
    a, b = wires
    state = _apply_1q(state, _u3(p[0], p[1], p[2]), a)
    state = _apply_1q(state, _u3(p[3], p[4], p[5]), b)
    state = _apply_2q(state, _CNOT, a, b)
    state = _apply_1q(state, _ry(p[6]), a)
    state = _apply_1q(state, _rz(p[7]), b)
    state = _apply_2q(state, _CNOT, b, a)
    state = _apply_1q(state, _ry(p[8]), a)
    state = _apply_2q(state, _CNOT, a, b)
    state = _apply_1q(state, _u3(p[9], p[10], p[11]), a)
    state = _apply_1q(state, _u3(p[12], p[13], p[14]), b)
    return state


def _conv_layer_1(state, p):
    for i in range(0, 8, 2):
        state = _u_su4(state, p, [i, i + 1])
    for i in range(1, 7, 2):
        state = _u_su4(state, p, [i, i + 1])
    state = _u_su4(state, p, [7, 0])
    return state


def _conv_layer_2(state, p):
    for w in ([2, 4], [6, 0], [0, 2], [4, 6]):
        state = _u_su4(state, p, w)
    return state


def _conv_layer_3(state, p):
    return _u_su4(state, p, [2, 6])


def _apply_circuit(state, weights):
    n = NUM_PARAMS_CONV
    state = _conv_layer_1(state, weights[0:n])
    state = _conv_layer_1(state, weights[n:2 * n])
    state = _conv_layer_2(state, weights[2 * n:3 * n])
    state = _conv_layer_2(state, weights[3 * n:4 * n])
    state = _conv_layer_3(state, weights[4 * n:5 * n])
    return state


def _build_unitary(weights):
    state = np.eye(DIM, dtype=np.complex128).reshape((2,) * N_QUBITS + (DIM,))
    state = _apply_circuit(state, weights)
    return state.reshape(DIM, DIM)


def _obs_on(pauli_by_wire):
    m = np.array([[1.0 + 0j]], dtype=np.complex128)
    for w in range(N_QUBITS):
        m = np.kron(m, pauli_by_wire.get(w, _I2))
    return m


def build_observables(latent_dim):
    if latent_dim == 1:
        specs = [{6: _Z}]
    elif latent_dim == 3:
        specs = [{2: _X}, {2: _Y}, {2: _Z}]
    elif latent_dim == 9:
        specs = [{2: _X}, {2: _Y}, {2: _Z},
                 {6: _X}, {6: _Y}, {6: _Z},
                 {2: _X, 6: _X}, {2: _Y, 6: _Y}, {2: _Z, 6: _Z}]
    elif latent_dim == 12:
        specs = [{2: _X}, {2: _Y}, {2: _Z},
                 {6: _X}, {6: _Y}, {6: _Z},
                 {2: _X, 6: _X}, {2: _Y, 6: _Y}, {2: _Z, 6: _Z},
                 {2: _X, 6: _Y}, {2: _Y, 6: _Z}, {2: _Z, 6: _X}]
    else:
        raise ValueError("unsupported latent_dim")
    return [_obs_on(s) for s in specs]


def build_A_packed(weights, latent_dim):
    """A_k = Re(U^dag O_k U) (real symmetric), packed as column blocks:
    A_all[:, k*DIM:(k+1)*DIM] = A_k  ->  (DIM, latent_dim*DIM) f32."""
    U = _build_unitary(weights)
    Udag = U.conj().T
    mats = [np.real(Udag @ O @ U) for O in build_observables(latent_dim)]
    return np.concatenate(mats, axis=1).astype(np.float32)


def reference_forward(x, weights, latent_dim):
    """Direct per-sample statevector simulation (NumPy), for correctness check."""
    B = x.shape[0]
    obs = build_observables(latent_dim)
    out = np.zeros((B, latent_dim), dtype=np.float32)
    for i in range(B):
        v = x[i].reshape(-1).astype(np.complex128)
        psi = v / np.linalg.norm(v)
        st = _apply_circuit(psi.reshape((2,) * N_QUBITS), weights)
        po = st.reshape(DIM)
        for k, O in enumerate(obs):
            out[i, k] = np.real(np.vdot(po, O @ po))
    return out


# ----------------------------------------------------------------------------
# Pallas TPU kernel.
# Single pass over the whole A_all (it fits VMEM on every TPU generation); the
# grid (if any) only tiles the batch axis, with A's block index held constant so
# A is fetched once and stays VMEM-resident.  Each step: normalize psi
# (VPU/XLU), ONE wide MXU dot psi @ A_all (bf16 in, f32 accumulate), then L
# 256-lane-aligned row reductions, written directly as a (block_B, L) block.
# ----------------------------------------------------------------------------
def qsvdd_kernel(x_ref, a_ref, o_ref):
    # x_ref: (bB, DIM) f32   a_ref: (DIM, L*DIM) A_DTYPE   o_ref: (bB, L) f32
    dim = x_ref.shape[1]
    num_obs = a_ref.shape[1] // dim

    x = x_ref[...]
    # AmplitudeEmbedding(normalize=True).  NOTE: an all-zero sample would give
    # inf/NaN here (the NumPy/PennyLane reference divides by zero too).
    inv_norm = jax.lax.rsqrt(jnp.sum(x * x, axis=-1, keepdims=True))
    psi = x * inv_norm                                        # (bB, DIM) f32

    # One fused MXU matmul over ALL observables.
    tmp = jnp.dot(psi.astype(a_ref.dtype), a_ref[...],
                  preferred_element_type=jnp.float32)         # (bB, L*DIM) f32

    # exp_k = sum_d tmp[:, k*DIM + d] * psi[:, d]; slices are 256-lane aligned.
    cols = []
    for k in range(num_obs):                                  # static unroll, L <= 12
        blk = tmp[:, k * dim:(k + 1) * dim]                   # (bB, DIM)
        cols.append(jnp.sum(blk * psi, axis=-1, keepdims=True))
    o_ref[...] = jnp.concatenate(cols, axis=-1)               # (bB, L)


def _pick_block_b(B):
    """Batch tile: whole batch for small B; otherwise the largest divisor of B
    that is a multiple of 8 and <= 512 (keeps tmp/x well under VMEM limits)."""
    if B <= 512:
        return B
    for cand in range(512, 7, -8):
        if B % cand == 0:
            return cand
    return B  # no aligned divisor -> single block


def qsvdd_forward(x, a_all):
    """x: (B, C, H, W) with C*H*W == 256;  a_all: (256, L*256)  ->  (B, L) f32."""
    B = x.shape[0]
    L = a_all.shape[1] // DIM
    x2d = x.reshape(B, DIM).astype(jnp.float32)

    block_b = _pick_block_b(B)
    num_b_tiles = B // block_b

    a_bytes = a_all.size * jnp.dtype(a_all.dtype).itemsize
    cost = pl.CostEstimate(
        flops=2 * B * L * DIM * DIM + 2 * B * L * DIM,
        transcendentals=B,
        bytes_accessed=a_bytes + B * DIM * 4 + B * L * 4,  # A fetched once, x once
    )

    out = pl.pallas_call(
        qsvdd_kernel,
        out_shape=jax.ShapeDtypeStruct((B, L), jnp.float32),
        grid=(num_b_tiles,),
        in_specs=[
            pl.BlockSpec((block_b, DIM), lambda i: (i, 0)),     # x: batch tiles
            pl.BlockSpec((DIM, L * DIM), lambda i: (0, 0)),     # A: constant, VMEM-resident
        ],
        out_specs=pl.BlockSpec((block_b, L), lambda i: (i, 0)),  # direct (B, L) layout
        compiler_params=pltpu.CompilerParams(
            # A's block index is constant across the batch axis, so keep the
            # axis "arbitrary" (fetch A once) rather than duplicating A per core.
            dimension_semantics=("arbitrary",)),
        cost_estimate=cost,
    )(x2d, a_all)

    return out


if __name__ == "__main__":
    key = jax.random.PRNGKey(0)
    wkey, xkey = jax.random.split(key)

    # Deterministic "parameters": quantum_weights ~ torch.randn(n_layers*num_params_conv)
    quantum_weights = jax.random.normal(
        wkey, (N_LAYERS * NUM_PARAMS_CONV,), dtype=jnp.float32)

    # Input: NCHW with 1*16*16 = 256 amplitudes per sample (8 qubits).
    B = 8
    x = jax.random.normal(xkey, (B, 1, 16, 16), dtype=jnp.float32)

    # Host glue: build the folded observable matrices once and place on device
    # once (model constant) -- not re-uploaded per forward call.
    weights_np = np.asarray(quantum_weights, dtype=np.float64)
    a_all_np = build_A_packed(weights_np, LATENT_DIM)          # (256, 9*256) f32
    a_all_dev = jax.device_put(jnp.asarray(a_all_np, dtype=A_DTYPE))

    forward = jax.jit(qsvdd_forward)
    out = jax.block_until_ready(forward(x, a_all_dev))

    ref = reference_forward(np.asarray(x), weights_np, LATENT_DIM)
    tol = 1e-2 if A_DTYPE == jnp.bfloat16 else 2e-3
    np.testing.assert_allclose(np.asarray(out), ref, atol=tol, rtol=tol)

    print("KERNEL_OK")
</pallas_src>

<mosaic_0001>
module attributes {stable_mosaic.version = 11 : i64} {
  func.func @qsvdd_kernel(%arg0: i32, %arg1: memref<8x256xf32, #tpu.memory_space<vmem>>, %arg2: memref<256x2304xbf16, #tpu.memory_space<vmem>>, %arg3: memref<8x9xf32, #tpu.memory_space<vmem>>) attributes {dimension_semantics = [#tpu.dimension_semantics<arbitrary>], iteration_bounds = array<i64: 1>, scalar_prefetch = 0 : i64, scratch_operands = 0 : i64, tpu.core_type = #tpu.core_type<tc>, window_params = [{transform_indices = @transform_0, window_bounds = array<i64: 8, 256>}, {pipeline_mode = #tpu.pipeline_mode<synchronous>, transform_indices = @transform_1, window_bounds = array<i64: 256, 2304>}, {transform_indices = @transform_2, window_bounds = array<i64: 8, 9>}]} {
    %c0 = arith.constant 0 : index
    %c0_0 = arith.constant 0 : index
    %0 = vector.load %arg1[%c0, %c0_0] : memref<8x256xf32, #tpu.memory_space<vmem>>, vector<8x256xf32>
    %1 = arith.mulf %0, %0 : vector<8x256xf32>
    %cst = arith.constant dense<0.000000e+00> : vector<8xf32>
    %2 = vector.multi_reduction <add>, %1, %cst [1] : vector<8x256xf32> to vector<8xf32>
    %3 = vector.shape_cast %2 : vector<8xf32> to vector<8x1xf32>
    %4 = math.rsqrt %3 : vector<8x1xf32>
    %5 = vector.broadcast %4 : vector<8x1xf32> to vector<8x256xf32>
    %6 = arith.mulf %0, %5 : vector<8x256xf32>
    %7 = arith.truncf %6 : vector<8x256xf32> to vector<8x256xbf16>
    %c0_1 = arith.constant 0 : index
    %c0_2 = arith.constant 0 : index
    %8 = vector.load %arg2[%c0_1, %c0_2] : memref<256x2304xbf16, #tpu.memory_space<vmem>>, vector<256x2304xbf16>
    %cst_3 = arith.constant dense<0.000000e+00> : vector<8x2304xf32>
    %9 = tpu.matmul %7, %8, %cst_3 {dimension_numbers = #tpu.dot_dimension_numbers<[1], [0], [0], [1], [0, 0, 1, 1], [], []>} : vector<8x256xbf16>, vector<256x2304xbf16>, vector<8x2304xf32> -> vector<8x2304xf32>
    %10 = vector.extract_strided_slice %9 {offsets = [0, 0], sizes = [8, 256], strides = [1, 1]} : vector<8x2304xf32> to vector<8x256xf32>
    %11 = arith.mulf %10, %6 : vector<8x256xf32>
    %cst_4 = arith.constant dense<0.000000e+00> : vector<8xf32>
    %12 = vector.multi_reduction <add>, %11, %cst_4 [1] : vector<8x256xf32> to vector<8xf32>
    %13 = vector.shape_cast %12 : vector<8xf32> to vector<8x1xf32>
    %14 = vector.extract_strided_slice %9 {offsets = [0, 256], sizes = [8, 256], strides = [1, 1]} : vector<8x2304xf32> to vector<8x256xf32>
    %15 = arith.mulf %14, %6 : vector<8x256xf32>
    %cst_5 = arith.constant dense<0.000000e+00> : vector<8xf32>
    %16 = vector.multi_reduction <add>, %15, %cst_5 [1] : vector<8x256xf32> to vector<8xf32>
    %17 = vector.shape_cast %16 : vector<8xf32> to vector<8x1xf32>
    %18 = vector.extract_strided_slice %9 {offsets = [0, 512], sizes = [8, 256], strides = [1, 1]} : vector<8x2304xf32> to vector<8x256xf32>
    %19 = arith.mulf %18, %6 : vector<8x256xf32>
    %cst_6 = arith.constant dense<0.000000e+00> : vector<8xf32>
    %20 = vector.multi_reduction <add>, %19, %cst_6 [1] : vector<8x256xf32> to vector<8xf32>
    %21 = vector.shape_cast %20 : vector<8xf32> to vector<8x1xf32>
    %22 = vector.extract_strided_slice %9 {offsets = [0, 768], sizes = [8, 256], strides = [1, 1]} : vector<8x2304xf32> to vector<8x256xf32>
    %23 = arith.mulf %22, %6 : vector<8x256xf32>
    %cst_7 = arith.constant dense<0.000000e+00> : vector<8xf32>
    %24 = vector.multi_reduction <add>, %23, %cst_7 [1] : vector<8x256xf32> to vector<8xf32>
    %25 = vector.shape_cast %24 : vector<8xf32> to vector<8x1xf32>
    %26 = vector.extract_strided_slice %9 {offsets = [0, 1024], sizes = [8, 256], strides = [1, 1]} : vector<8x2304xf32> to vector<8x256xf32>
    %27 = arith.mulf %26, %6 : vector<8x256xf32>
    %cst_8 = arith.constant dense<0.000000e+00> : vector<8xf32>
    %28 = vector.multi_reduction <add>, %27, %cst_8 [1] : vector<8x256xf32> to vector<8xf32>
    %29 = vector.shape_cast %28 : vector<8xf32> to vector<8x1xf32>
    %30 = vector.extract_strided_slice %9 {offsets = [0, 1280], sizes = [8, 256], strides = [1, 1]} : vector<8x2304xf32> to vector<8x256xf32>
    %31 = arith.mulf %30, %6 : vector<8x256xf32>
    %cst_9 = arith.constant dense<0.000000e+00> : vector<8xf32>
    %32 = vector.multi_reduction <add>, %31, %cst_9 [1] : vector<8x256xf32> to vector<8xf32>
    %33 = vector.shape_cast %32 : vector<8xf32> to vector<8x1xf32>
    %34 = vector.extract_strided_slice %9 {offsets = [0, 1536], sizes = [8, 256], strides = [1, 1]} : vector<8x2304xf32> to vector<8x256xf32>
    %35 = arith.mulf %34, %6 : vector<8x256xf32>
    %cst_10 = arith.constant dense<0.000000e+00> : vector<8xf32>
    %36 = vector.multi_reduction <add>, %35, %cst_10 [1] : vector<8x256xf32> to vector<8xf32>
    %37 = vector.shape_cast %36 : vector<8xf32> to vector<8x1xf32>
    %38 = vector.extract_strided_slice %9 {offsets = [0, 1792], sizes = [8, 256], strides = [1, 1]} : vector<8x2304xf32> to vector<8x256xf32>
    %39 = arith.mulf %38, %6 : vector<8x256xf32>
    %cst_11 = arith.constant dense<0.000000e+00> : vector<8xf32>
    %40 = vector.multi_reduction <add>, %39, %cst_11 [1] : vector<8x256xf32> to vector<8xf32>
    %41 = vector.shape_cast %40 : vector<8xf32> to vector<8x1xf32>
    %42 = vector.extract_strided_slice %9 {offsets = [0, 2048], sizes = [8, 256], strides = [1, 1]} : vector<8x2304xf32> to vector<8x256xf32>
    %43 = arith.mulf %42, %6 : vector<8x256xf32>
    %cst_12 = arith.constant dense<0.000000e+00> : vector<8xf32>
    %44 = vector.multi_reduction <add>, %43, %cst_12 [1] : vector<8x256xf32> to vector<8xf32>
    %45 = vector.shape_cast %44 : vector<8xf32> to vector<8x1xf32>
    %46 = tpu.concatenate %13, %17, %21, %25, %29, %33, %37, %41, %45 in 1 : vector<8x1xf32>, vector<8x1xf32>, vector<8x1xf32>, vector<8x1xf32>, vector<8x1xf32>, vector<8x1xf32>, vector<8x1xf32>, vector<8x1xf32>, vector<8x1xf32> -> vector<8x9xf32>
    %c0_13 = arith.constant 0 : index
    %c0_14 = arith.constant 0 : index
    %47 = vector.load %arg3[%c0_13, %c0_14] : memref<8x9xf32, #tpu.memory_space<vmem>>, vector<8x9xf32>
    tpu.vector_store %arg3[%c0_13, %c0_14], %46 {strides = array<i32>} : memref<8x9xf32, #tpu.memory_space<vmem>>, vector<8x9xf32>,
    return
  }
  func.func @transform_0(%arg0: i32) -> (i32, i32) {
    %c0_i32 = arith.constant 0 : i32
    %c0_i32_0 = arith.constant 0 : i32
    return %arg0, %c0_i32 : i32, i32
  }
  func.func @transform_1(%arg0: i32) -> (i32, i32) {
    %c0_i32 = arith.constant 0 : i32
    %c0_i32_0 = arith.constant 0 : i32
    %c0_i32_1 = arith.constant 0 : i32
    return %c0_i32, %c0_i32_0 : i32, i32
  }
  func.func @transform_2(%arg0: i32) -> (i32, i32) {
    %c0_i32 = arith.constant 0 : i32
    %c0_i32_0 = arith.constant 0 : i32
    return %arg0, %c0_i32 : i32, i32
  }
}

</mosaic_0001>

<llo_original>
// kernel: qsvdd_forward.1
$region0: #{qsvdd_forward.1}
  #allocation0 [shape = 'u32[]', space=smem, size = 0x4, offset = 0x4, fixed_abs, tag = 'smem constant byte address 0x4 - core index']
  #allocation1 [shape = 'u32[144,128]{1,0:T(1,128)}', space=vmem, size = 0x12000, scoped, tag = 'internal scratch']
  %s0 = inlined_call_operand.vmem [shape: f32[8,256], index: 0, kind: input, shape index: {}]
  %s1 = inlined_call_operand.hbm [shape: bf16[256,2304], index: 1, kind: input, shape index: {}]
  %s2 = inlined_call_operand.hbm [shape: f32[8,9], index: 2, kind: output, shape index: {}]
  %s3 = sld [smem:[#allocation0]]
  $region22: #{qsvdd_forward.1} parent=0
    _
  %s5 = ssub.s32 1, %s3
  %s6 = scalar_select 0, %s5, %s3
  $region1: #{qsvdd_forward.1} parent=0
    #allocation2 [shape = 'u8[1179648]{0}', space=vmem, size = 0x120000, scoped, tag = 'input window, operand 1, single buffered']
    #allocation3 [shape = 's32[1]{0}', space=sflag, size = 0x4, scoped, tag = 'scoped memory for qsvdd_forward.1']
    #allocation4 [shape = 's32[1]{0}', space=sflag, size = 0x4, scoped, tag = 'scoped memory for qsvdd_forward.1']
    #allocation5 [shape = 'u8[4096]{0}', space=vmem, size = 0x1000, scoped, tag = 'output window, operand 0, single buffered']
    %7 = vsyncpa [#allocation3], 0
    %8 = vsyncpa [#allocation4], 0
    // Predicated region
    $region2: #{qsvdd_forward.1} parent=1 // pred_check
      _
    $region3: #{qsvdd_forward.1} parent=1 // pred_check_branch
      %10 = sbr.rel (0) target = $region5
    $region4: #{qsvdd_forward.1} parent=1 // pred_region
      _
    $region5: #{qsvdd_forward.1} parent=1 // pred_fallthru
      _
    // Predicated region
    $region6: #{qsvdd_forward.1} parent=1 // pred_check
      _
    $region7: #{qsvdd_forward.1} parent=1 // pred_check_branch
      %12 = sbr.rel (0) target = $region9
    $region8: #{qsvdd_forward.1} parent=1 // pred_region
      %s14 = ssub.s32 36864, 36864
      %15 = vsyncadd [#allocation3], %s14
      %s16 = sshll.u32 [#allocation2], 4
      %s17 = int_to_ptr.vmem [resolvable:$true] %s16
      %22 = dma.hbm_to_vmem [thread:$0]  %s1, 36864, %s17, [#allocation3], 1152, 1152, 72
    $region9: #{qsvdd_forward.1} parent=1 // pred_fallthru
      _
    // Predicated region
    $region10: #{qsvdd_forward.1} parent=1 // pred_check
      _
    $region11: #{qsvdd_forward.1} parent=1 // pred_check_branch
      %24 = sbr.rel (0) target = $region13
    $region12: #{qsvdd_forward.1} parent=1 // pred_region
      %25 = dma.done [#allocation3], 36864
    $region13: #{qsvdd_forward.1} parent=1 // pred_fallthru
      _
    %v26 = vld [vmem:[%s0] sm:$0xff]
    %v27 = vld [vmem:[%s0 + $0x8] sm:$0xff]
    %v28 = vmul.f32 %v26, %v26
    %v29 = vmul.f32 %v27, %v27
    %v30 = vadd.f32 %v28, %v29
    %31 = vadd.xlane.f32.xlu0 %v30
    %v32 = vpop.xlane.xlu0 %31
    %v33 = vrsqrt.pop %v32
    %v34 = vmul.f32 %v26, %v33
    %v35 = vmul.f32 %v27, %v33
    %v36 = vpack.c.bf16 %v34, %v34
    %v37 = vpack.c.bf16 %v35, %v35
    %v38 = vld [vmem:[#allocation2] sm:$0xff]
    %v39 = vld [vmem:[#allocation2 + $0x8] sm:$0xff]
    %v40 = vld [vmem:[#allocation2 + $0x10] sm:$0xff]
    %v41 = vld [vmem:[#allocation2 + $0x18] sm:$0xff]
    %v42 = vld [vmem:[#allocation2 + $0x20] sm:$0xff]
    %v43 = vld [vmem:[#allocation2 + $0x28] sm:$0xff]
    %v44 = vld [vmem:[#allocation2 + $0x30] sm:$0xff]
    %v45 = vld [vmem:[#allocation2 + $0x38] sm:$0xff]
    %v46 = vld [vmem:[#allocation2 + $0x40] sm:$0xff]
    %v47 = vld [vmem:[#allocation2 + $0x48] sm:$0xff]
    %v48 = vld [vmem:[#allocation2 + $0x50] sm:$0xff]
    %v49 = vld [vmem:[#allocation2 + $0x58] sm:$0xff]
    %v50 = vld [vmem:[#allocation2 + $0x60] sm:$0xff]
    %v51 = vld [vmem:[#allocation2 + $0x68] sm:$0xff]
    %v52 = vld [vmem:[#allocation2 + $0x70] sm:$0xff]
    %v53 = vld [vmem:[#allocation2 + $0x78] sm:$0xff]
    %v54 = vld [vmem:[#allocation2 + $0x80] sm:$0xff]
    %v55 = vld [vmem:[#allocation2 + $0x88] sm:$0xff]
    %v56 = vld [vmem:[#allocation2 + $0x90] sm:$0xff]
    %v57 = vld [vmem:[#allocation2 + $0x98] sm:$0xff]
    %v58 = vld [vmem:[#allocation2 + $0xa0] sm:$0xff]
    %v59 = vld [vmem:[#allocation2 + $0xa8] sm:$0xff]
    %v60 = vld [vmem:[#allocation2 + $0xb0] sm:$0xff]
    %v61 = vld [vmem:[#allocation2 + $0xb8] sm:$0xff]
    %v62 = vld [vmem:[#allocation2 + $0xc0] sm:$0xff]
    %v63 = vld [vmem:[#allocation2 + $0xc8] sm:$0xff]
    %v64 = vld [vmem:[#allocation2 + $0xd0] sm:$0xff]
    %v65 = vld [vmem:[#allocation2 + $0xd8] sm:$0xff]
    %v66 = vld [vmem:[#allocation2 + $0xe0] sm:$0xff]
    %v67 = vld [vmem:[#allocation2 + $0xe8] sm:$0xff]
    %v68 = vld [vmem:[#allocation2 + $0xf0] sm:$0xff]
    %v69 = vld [vmem:[#allocation2 + $0xf8] sm:$0xff]
    %v70 = vld [vmem:[#allocation2 + $0x100] sm:$0xff]
    %v71 = vld [vmem:[#allocation2 + $0x108] sm:$0xff]
    %v72 = vld [vmem:[#allocation2 + $0x110] sm:$0xff]
    %v73 = vld [vmem:[#allocation2 + $0x118] sm:$0xff]
    %v74 = vld [vmem:[#allocation2 + $0x120] sm:$0xff]
    %v75 = vld [vmem:[#allocation2 + $0x128] sm:$0xff]
    %v76 = vld [vmem:[#allocation2 + $0x130] sm:$0xff]
    %v77 = vld [vmem:[#allocation2 + $0x138] sm:$0xff]
    %v78 = vld [vmem:[#allocation2 + $0x140] sm:$0xff]
    %v79 = vld [vmem:[#allocation2 + $0x148] sm:$0xff]
    %v80 = vld [vmem:[#allocation2 + $0x150] sm:$0xff]
    %v81 = vld [vmem:[#allocation2 + $0x158] sm:$0xff]
    %v82 = vld [vmem:[#allocation2 + $0x160] sm:$0xff]
    %v83 = vld [vmem:[#allocation2 + $0x168] sm:$0xff]
    %v84 = vld [vmem:[#allocation2 + $0x170] sm:$0xff]
    %v85 = vld [vmem:[#allocation2 + $0x178] sm:$0xff]
    %v86 = vld [vmem:[#allocation2 + $0x180] sm:$0xff]
    %v87 = vld [vmem:[#allocation2 + $0x188] sm:$0xff]
    %v88 = vld [vmem:[#allocation2 + $0x190] sm:$0xff]
    %v89 = vld [vmem:[#allocation2 + $0x198] sm:$0xff]
    %v90 = vld [vmem:[#allocation2 + $0x1a0] sm:$0xff]
    %v91 = vld [vmem:[#allocation2 + $0x1a8] sm:$0xff]
    %v92 = vld [vmem:[#allocation2 + $0x1b0] sm:$0xff]
    %v93 = vld [vmem:[#allocation2 + $0x1b8] sm:$0xff]
    %v94 = vld [vmem:[#allocation2 + $0x1c0] sm:$0xff]
    %v95 = vld [vmem:[#allocation2 + $0x1c8] sm:$0xff]
    %v96 = vld [vmem:[#allocation2 + $0x1d0] sm:$0xff]
    %v97 = vld [vmem:[#allocation2 + $0x1d8] sm:$0xff]
    %v98 = vld [vmem:[#allocation2 + $0x1e0] sm:$0xff]
    %v99 = vld [vmem:[#allocation2 + $0x1e8] sm:$0xff]
    %v100 = vld [vmem:[#allocation2 + $0x1f0] sm:$0xff]
    %v101 = vld [vmem:[#allocation2 + $0x1f8] sm:$0xff]
    %v102 = vld [vmem:[#allocation2 + $0x200] sm:$0xff]
    %v103 = vld [vmem:[#allocation2 + $0x208] sm:$0xff]
    %v104 = vld [vmem:[#allocation2 + $0x210] sm:$0xff]
    %v105 = vld [vmem:[#allocation2 + $0x218] sm:$0xff]
    %v106 = vld [vmem:[#allocation2 + $0x220] sm:$0xff]
    %v107 = vld [vmem:[#allocation2 + $0x228] sm:$0xff]
    %v108 = vld [vmem:[#allocation2 + $0x230] sm:$0xff]
    %v109 = vld [vmem:[#allocation2 + $0x238] sm:$0xff]
    %v110 = vld [vmem:[#allocation2 + $0x240] sm:$0xff]
    %v111 = vld [vmem:[#allocation2 + $0x248] sm:$0xff]
    %v112 = vld [vmem:[#allocation2 + $0x250] sm:$0xff]
    %v113 = vld [vmem:[#allocation2 + $0x258] sm:$0xff]
    %v114 = vld [vmem:[#allocation2 + $0x260] sm:$0xff]
    %v115 = vld [vmem:[#allocation2 + $0x268] sm:$0xff]
    %v116 = vld [vmem:[#allocation2 + $0x270] sm:$0xff]
    %v117 = vld [vmem:[#allocation2 + $0x278] sm:$0xff]
    %v118 = vld [vmem:[#allocation2 + $0x280] sm:$0xff]
    %v119 = vld [vmem:[#allocation2 + $0x288] sm:$0xff]
    %v120 = vld [vmem:[#allocation2 + $0x290] sm:$0xff]
    %v121 = vld [vmem:[#allocation2 + $0x298] sm:$0xff]
    %v122 = vld [vmem:[#allocation2 + $0x2a0] sm:$0xff]
    %v123 = vld [vmem:[#allocation2 + $0x2a8] sm:$0xff]
    %v124 = vld [vmem:[#allocation2 + $0x2b0] sm:$0xff]
    %v125 = vld [vmem:[#allocation2 + $0x2b8] sm:$0xff]
    %v126 = vld [vmem:[#allocation2 + $0x2c0] sm:$0xff]
    %v127 = vld [vmem:[#allocation2 + $0x2c8] sm:$0xff]
    %v128 = vld [vmem:[#allocation2 + $0x2d0] sm:$0xff]
    %v129 = vld [vmem:[#allocation2 + $0x2d8] sm:$0xff]
    %v130 = vld [vmem:[#allocation2 + $0x2e0] sm:$0xff]
    %v131 = vld [vmem:[#allocation2 + $0x2e8] sm:$0xff]
    %v132 = vld [vmem:[#allocation2 + $0x2f0] sm:$0xff]
    %v133 = vld [vmem:[#allocation2 + $0x2f8] sm:$0xff]
    %v134 = vld [vmem:[#allocation2 + $0x300] sm:$0xff]
    %v135 = vld [vmem:[#allocation2 + $0x308] sm:$0xff]
    %v136 = vld [vmem:[#allocation2 + $0x310] sm:$0xff]
    %v137 = vld [vmem:[#allocation2 + $0x318] sm:$0xff]
    %v138 = vld [vmem:[#allocation2 + $0x320] sm:$0xff]
    %v139 = vld [vmem:[#allocation2 + $0x328] sm:$0xff]
    %v140 = vld [vmem:[#allocation2 + $0x330] sm:$0xff]
    %v141 = vld [vmem:[#allocation2 + $0x338] sm:$0xff]
    %v142 = vld [vmem:[#allocation2 + $0x340] sm:$0xff]
    %v143 = vld [vmem:[#allocation2 + $0x348] sm:$0xff]
    %v144 = vld [vmem:[#allocation2 + $0x350] sm:$0xff]
    %v145 = vld [vmem:[#allocation2 + $0x358] sm:$0xff]
    %v146 = vld [vmem:[#allocation2 + $0x360] sm:$0xff]
    %v147 = vld [vmem:[#allocation2 + $0x368] sm:$0xff]
    %v148 = vld [vmem:[#allocation2 + $0x370] sm:$0xff]
    %v149 = vld [vmem:[#allocation2 + $0x378] sm:$0xff]
    %v150 = vld [vmem:[#allocation2 + $0x380] sm:$0xff]
    %v151 = vld [vmem:[#allocation2 + $0x388] sm:$0xff]
    %v152 = vld [vmem:[#allocation2 + $0x390] sm:$0xff]
    %v153 = vld [vmem:[#allocation2 + $0x398] sm:$0xff]
    %v154 = vld [vmem:[#allocation2 + $0x3a0] sm:$0xff]
    %v155 = vld [vmem:[#allocation2 + $0x3a8] sm:$0xff]
    %v156 = vld [vmem:[#allocation2 + $0x3b0] sm:$0xff]
    %v157 = vld [vmem:[#allocation2 + $0x3b8] sm:$0xff]
    %v158 = vld [vmem:[#allocation2 + $0x3c0] sm:$0xff]
    %v159 = vld [vmem:[#allocation2 + $0x3c8] sm:$0xff]
    %v160 = vld [vmem:[#allocation2 + $0x3d0] sm:$0xff]
    %v161 = vld [vmem:[#allocation2 + $0x3d8] sm:$0xff]
    %v162 = vld [vmem:[#allocation2 + $0x3e0] sm:$0xff]
    %v163 = vld [vmem:[#allocation2 + $0x3e8] sm:$0xff]
    %v164 = vld [vmem:[#allocation2 + $0x3f0] sm:$0xff]
    %v165 = vld [vmem:[#allocation2 + $0x3f8] sm:$0xff]
    %v166 = vld [vmem:[#allocation2 + $0x400] sm:$0xff]
    %v167 = vld [vmem:[#allocation2 + $0x408] sm:$0xff]
    %v168 = vld [vmem:[#allocation2 + $0x410] sm:$0xff]
    %v169 = vld [vmem:[#allocation2 + $0x418] sm:$0xff]
    %v170 = vld [vmem:[#allocation2 + $0x420] sm:$0xff]
    %v171 = vld [vmem:[#allocation2 + $0x428] sm:$0xff]
    %v172 = vld [vmem:[#allocation2 + $0x430] sm:$0xff]
    %v173 = vld [vmem:[#allocation2 + $0x438] sm:$0xff]
    %v174 = vld [vmem:[#allocation2 + $0x440] sm:$0xff]
    %v175 = vld [vmem:[#allocation2 + $0x448] sm:$0xff]
    %v176 = vld [vmem:[#allocation2 + $0x450] sm:$0xff]
    %v177 = vld [vmem:[#allocation2 + $0x458] sm:$0xff]
    %v178 = vld [vmem:[#allocation2 + $0x460] sm:$0xff]
    %v179 = vld [vmem:[#allocation2 + $0x468] sm:$0xff]
    %v180 = vld [vmem:[#allocation2 + $0x470] sm:$0xff]
    %v181 = vld [vmem:[#allocation2 + $0x478] sm:$0xff]
    %v182 = vld [vmem:[#allocation2 + $0x480] sm:$0xff]
    %v183 = vld [vmem:[#allocation2 + $0x488] sm:$0xff]
    %v184 = vld [vmem:[#allocation2 + $0x490] sm:$0xff]
    %v185 = vld [vmem:[#allocation2 + $0x498] sm:$0xff]
    %v186 = vld [vmem:[#allocation2 + $0x4a0] sm:$0xff]
    %v187 = vld [vmem:[#allocation2 + $0x4a8] sm:$0xff]
    %v188 = vld [vmem:[#allocation2 + $0x4b0] sm:$0xff]
    %v189 = vld [vmem:[#allocation2 + $0x4b8] sm:$0xff]
    %v190 = vld [vmem:[#allocation2 + $0x4c0] sm:$0xff]
    %v191 = vld [vmem:[#allocation2 + $0x4c8] sm:$0xff]
    %v192 = vld [vmem:[#allocation2 + $0x4d0] sm:$0xff]
    %v193 = vld [vmem:[#allocation2 + $0x4d8] sm:$0xff]
    %v194 = vld [vmem:[#allocation2 + $0x4e0] sm:$0xff]
    %v195 = vld [vmem:[#allocation2 + $0x4e8] sm:$0xff]
    %v196 = vld [vmem:[#allocation2 + $0x4f0] sm:$0xff]
    %v197 = vld [vmem:[#allocation2 + $0x4f8] sm:$0xff]
    %v198 = vld [vmem:[#allocation2 + $0x500] sm:$0xff]
    %v199 = vld [vmem:[#allocation2 + $0x508] sm:$0xff]
    %v200 = vld [vmem:[#allocation2 + $0x510] sm:$0xff]
    %v201 = vld [vmem:[#allocation2 + $0x518] sm:$0xff]
    %v202 = vld [vmem:[#allocation2 + $0x520] sm:$0xff]
    %v203 = vld [vmem:[#allocation2 + $0x528] sm:$0xff]
    %v204 = vld [vmem:[#allocation2 + $0x530] sm:$0xff]
    %v205 = vld [vmem:[#allocation2 + $0x538] sm:$0xff]
    %v206 = vld [vmem:[#allocation2 + $0x540] sm:$0xff]
    %v207 = vld [vmem:[#allocation2 + $0x548] sm:$0xff]
    %v208 = vld [vmem:[#allocation2 + $0x550] sm:$0xff]
    %v209 = vld [vmem:[#allocation2 + $0x558] sm:$0xff]
    %v210 = vld [vmem:[#allocation2 + $0x560] sm:$0xff]
    %v211 = vld [vmem:[#allocation2 + $0x568] sm:$0xff]
    %v212 = vld [vmem:[#allocation2 + $0x570] sm:$0xff]
    %v213 = vld [vmem:[#allocation2 + $0x578] sm:$0xff]
    %v214 = vld [vmem:[#allocation2 + $0x580] sm:$0xff]
    %v215 = vld [vmem:[#allocation2 + $0x588] sm:$0xff]
    %v216 = vld [vmem:[#allocation2 + $0x590] sm:$0xff]
    %v217 = vld [vmem:[#allocation2 + $0x598] sm:$0xff]
    %v218 = vld [vmem:[#allocation2 + $0x5a0] sm:$0xff]
    %v219 = vld [vmem:[#allocation2 + $0x5a8] sm:$0xff]
    %v220 = vld [vmem:[#allocation2 + $0x5b0] sm:$0xff]
    %v221 = vld [vmem:[#allocation2 + $0x5b8] sm:$0xff]
    %v222 = vld [vmem:[#allocation2 + $0x5c0] sm:$0xff]
    %v223 = vld [vmem:[#allocation2 + $0x5c8] sm:$0xff]
    %v224 = vld [vmem:[#allocation2 + $0x5d0] sm:$0xff]
    %v225 = vld [vmem:[#allocation2 + $0x5d8] sm:$0xff]
    %v226 = vld [vmem:[#allocation2 + $0x5e0] sm:$0xff]
    %v227 = vld [vmem:[#allocation2 + $0x5e8] sm:$0xff]
    %v228 = vld [vmem:[#allocation2 + $0x5f0] sm:$0xff]
    %v229 = vld [vmem:[#allocation2 + $0x5f8] sm:$0xff]
    %v230 = vld [vmem:[#allocation2 + $0x600] sm:$0xff]
    %v231 = vld [vmem:[#allocation2 + $0x608] sm:$0xff]
    %v232 = vld [vmem:[#allocation2 + $0x610] sm:$0xff]
    %v233 = vld [vmem:[#allocation2 + $0x618] sm:$0xff]
    %v234 = vld [vmem:[#allocation2 + $0x620] sm:$0xff]
    %v235 = vld [vmem:[#allocation2 + $0x628] sm:$0xff]
    %v236 = vld [vmem:[#allocation2 + $0x630] sm:$0xff]
    %v237 = vld [vmem:[#allocation2 + $0x638] sm:$0xff]
    %v238 = vld [vmem:[#allocation2 + $0x640] sm:$0xff]
    %v239 = vld [vmem:[#allocation2 + $0x648] sm:$0xff]
    %v240 = vld [vmem:[#allocation2 + $0x650] sm:$0xff]
    %v241 = vld [vmem:[#allocation2 + $0x658] sm:$0xff]
    %v242 = vld [vmem:[#allocation2 + $0x660] sm:$0xff]
    %v243 = vld [vmem:[#allocation2 + $0x668] sm:$0xff]
    %v244 = vld [vmem:[#allocation2 + $0x670] sm:$0xff]
    %v245 = vld [vmem:[#allocation2 + $0x678] sm:$0xff]
    %v246 = vld [vmem:[#allocation2 + $0x680] sm:$0xff]
    %v247 = vld [vmem:[#allocation2 + $0x688] sm:$0xff]
    %v248 = vld [vmem:[#allocation2 + $0x690] sm:$0xff]
    %v249 = vld [vmem:[#allocation2 + $0x698] sm:$0xff]
    %v250 = vld [vmem:[#allocation2 + $0x6a0] sm:$0xff]
    %v251 = vld [vmem:[#allocation2 + $0x6a8] sm:$0xff]
    %v252 = vld [vmem:[#allocation2 + $0x6b0] sm:$0xff]
    %v253 = vld [vmem:[#allocation2 + $0x6b8] sm:$0xff]
    %v254 = vld [vmem:[#allocation2 + $0x6c0] sm:$0xff]
    %v255 = vld [vmem:[#allocation2 + $0x6c8] sm:$0xff]
    %v256 = vld [vmem:[#allocation2 + $0x6d0] sm:$0xff]
    %v257 = vld [vmem:[#allocation2 + $0x6d8] sm:$0xff]
    %v258 = vld [vmem:[#allocation2 + $0x6e0] sm:$0xff]
    %v259 = vld [vmem:[#allocation2 + $0x6e8] sm:$0xff]
    %v260 = vld [vmem:[#allocation2 + $0x6f0] sm:$0xff]
    %v261 = vld [vmem:[#allocation2 + $0x6f8] sm:$0xff]
    %v262 = vld [vmem:[#allocation2 + $0x700] sm:$0xff]
    %v263 = vld [vmem:[#allocation2 + $0x708] sm:$0xff]
    %v264 = vld [vmem:[#allocation2 + $0x710] sm:$0xff]
    %v265 = vld [vmem:[#allocation2 + $0x718] sm:$0xff]
    %v266 = vld [vmem:[#allocation2 + $0x720] sm:$0xff]
    %v267 = vld [vmem:[#allocation2 + $0x728] sm:$0xff]
    %v268 = vld [vmem:[#allocation2 + $0x730] sm:$0xff]
    %v269 = vld [vmem:[#allocation2 + $0x738] sm:$0xff]
    %v270 = vld [vmem:[#allocation2 + $0x740] sm:$0xff]
    %v271 = vld [vmem:[#allocation2 + $0x748] sm:$0xff]
    %v272 = vld [vmem:[#allocation2 + $0x750] sm:$0xff]
    %v273 = vld [vmem:[#allocation2 + $0x758] sm:$0xff]
    %v274 = vld [vmem:[#allocation2 + $0x760] sm:$0xff]
    %v275 = vld [vmem:[#allocation2 + $0x768] sm:$0xff]
    %v276 = vld [vmem:[#allocation2 + $0x770] sm:$0xff]
    %v277 = vld [vmem:[#allocation2 + $0x778] sm:$0xff]
    %v278 = vld [vmem:[#allocation2 + $0x780] sm:$0xff]
    %v279 = vld [vmem:[#allocation2 + $0x788] sm:$0xff]
    %v280 = vld [vmem:[#allocation2 + $0x790] sm:$0xff]
    %v281 = vld [vmem:[#allocation2 + $0x798] sm:$0xff]
    %v282 = vld [vmem:[#allocation2 + $0x7a0] sm:$0xff]
    %v283 = vld [vmem:[#allocation2 + $0x7a8] sm:$0xff]
    %v284 = vld [vmem:[#allocation2 + $0x7b0] sm:$0xff]
    %v285 = vld [vmem:[#allocation2 + $0x7b8] sm:$0xff]
    %v286 = vld [vmem:[#allocation2 + $0x7c0] sm:$0xff]
    %v287 = vld [vmem:[#allocation2 + $0x7c8] sm:$0xff]
    %v288 = vld [vmem:[#allocation2 + $0x7d0] sm:$0xff]
    %v289 = vld [vmem:[#allocation2 + $0x7d8] sm:$0xff]
    %v290 = vld [vmem:[#allocation2 + $0x7e0] sm:$0xff]
    %v291 = vld [vmem:[#allocation2 + $0x7e8] sm:$0xff]
    %v292 = vld [vmem:[#allocation2 + $0x7f0] sm:$0xff]
    %v293 = vld [vmem:[#allocation2 + $0x7f8] sm:$0xff]
    %v294 = vld [vmem:[#allocation2 + $0x800] sm:$0xff]
    %v295 = vld [vmem:[#allocation2 + $0x808] sm:$0xff]
    %v296 = vld [vmem:[#allocation2 + $0x810] sm:$0xff]
    %v297 = vld [vmem:[#allocation2 + $0x818] sm:$0xff]
    %v298 = vld [vmem:[#allocation2 + $0x820] sm:$0xff]
    %v299 = vld [vmem:[#allocation2 + $0x828] sm:$0xff]
    %v300 = vld [vmem:[#allocation2 + $0x830] sm:$0xff]
    %v301 = vld [vmem:[#allocation2 + $0x838] sm:$0xff]
    %v302 = vld [vmem:[#allocation2 + $0x840] sm:$0xff]
    %v303 = vld [vmem:[#allocation2 + $0x848] sm:$0xff]
    %v304 = vld [vmem:[#allocation2 + $0x850] sm:$0xff]
    %v305 = vld [vmem:[#allocation2 + $0x858] sm:$0xff]
    %v306 = vld [vmem:[#allocation2 + $0x860] sm:$0xff]
    %v307 = vld [vmem:[#allocation2 + $0x868] sm:$0xff]
    %v308 = vld [vmem:[#allocation2 + $0x870] sm:$0xff]
    %v309 = vld [vmem:[#allocation2 + $0x878] sm:$0xff]
    %v310 = vld [vmem:[#allocation2 + $0x880] sm:$0xff]
    %v311 = vld [vmem:[#allocation2 + $0x888] sm:$0xff]
    %v312 = vld [vmem:[#allocation2 + $0x890] sm:$0xff]
    %v313 = vld [vmem:[#allocation2 + $0x898] sm:$0xff]
    %v314 = vld [vmem:[#allocation2 + $0x8a0] sm:$0xff]
    %v315 = vld [vmem:[#allocation2 + $0x8a8] sm:$0xff]
    %v316 = vld [vmem:[#allocation2 + $0x8b0] sm:$0xff]
    %v317 = vld [vmem:[#allocation2 + $0x8b8] sm:$0xff]
    %v318 = vld [vmem:[#allocation2 + $0x8c0] sm:$0xff]
    %v319 = vld [vmem:[#allocation2 + $0x8c8] sm:$0xff]
    %v320 = vld [vmem:[#allocation2 + $0x8d0] sm:$0xff]
    %v321 = vld [vmem:[#allocation2 + $0x8d8] sm:$0xff]
    %v322 = vld [vmem:[#allocation2 + $0x8e0] sm:$0xff]
    %v323 = vld [vmem:[#allocation2 + $0x8e8] sm:$0xff]
    %v324 = vld [vmem:[#allocation2 + $0x8f0] sm:$0xff]
    %v325 = vld [vmem:[#allocation2 + $0x8f8] sm:$0xff]
    %v614 = vunpack.c.l.b16 %v38
    %v615 = vunpack.c.h.b16 %v38
    %v616 = vunpack.c.l.b16 %v39
    %v617 = vunpack.c.h.b16 %v39
    %v618 = vunpack.c.l.b16 %v40
    %v619 = vunpack.c.h.b16 %v40
    %v620 = vunpack.c.l.b16 %v41
    %v621 = vunpack.c.h.b16 %v41
    %v622 = vunpack.c.l.b16 %v42
    %v623 = vunpack.c.h.b16 %v42
    %v624 = vunpack.c.l.b16 %v43
    %v625 = vunpack.c.h.b16 %v43
    %v626 = vunpack.c.l.b16 %v44
    %v627 = vunpack.c.h.b16 %v44
    %v628 = vunpack.c.l.b16 %v45
    %v629 = vunpack.c.h.b16 %v45
    %v630 = vunpack.c.l.b16 %v46
    %v631 = vunpack.c.h.b16 %v46
    %v632 = vunpack.c.l.b16 %v47
    %v633 = vunpack.c.h.b16 %v47
    %v634 = vunpack.c.l.b16 %v48
    %v635 = vunpack.c.h.b16 %v48
    %v636 = vunpack.c.l.b16 %v49
    %v637 = vunpack.c.h.b16 %v49
    %v638 = vunpack.c.l.b16 %v50
    %v639 = vunpack.c.h.b16 %v50
    %v640 = vunpack.c.l.b16 %v51
    %v641 = vunpack.c.h.b16 %v51
    %v642 = vunpack.c.l.b16 %v52
    %v643 = vunpack.c.h.b16 %v52
    %v644 = vunpack.c.l.b16 %v53
    %v645 = vunpack.c.h.b16 %v53
    %v646 = vunpack.c.l.b16 %v54
    %v647 = vunpack.c.h.b16 %v54
    %v648 = vunpack.c.l.b16 %v55
    %v649 = vunpack.c.h.b16 %v55
    %v650 = vunpack.c.l.b16 %v56
    %v651 = vunpack.c.h.b16 %v56
    %v652 = vunpack.c.l.b16 %v57
    %v653 = vunpack.c.h.b16 %v57
    %v654 = vunpack.c.l.b16 %v58
    %v655 = vunpack.c.h.b16 %v58
    %v656 = vunpack.c.l.b16 %v59
    %v657 = vunpack.c.h.b16 %v59
    %v658 = vunpack.c.l.b16 %v60
    %v659 = vunpack.c.h.b16 %v60
    %v660 = vunpack.c.l.b16 %v61
    %v661 = vunpack.c.h.b16 %v61
    %v662 = vunpack.c.l.b16 %v62
    %v663 = vunpack.c.h.b16 %v62
    %v664 = vunpack.c.l.b16 %v63
    %v665 = vunpack.c.h.b16 %v63
    %v666 = vunpack.c.l.b16 %v64
    %v667 = vunpack.c.h.b16 %v64
    %v668 = vunpack.c.l.b16 %v65
    %v669 = vunpack.c.h.b16 %v65
    %v670 = vunpack.c.l.b16 %v66
    %v671 = vunpack.c.h.b16 %v66
    %v672 = vunpack.c.l.b16 %v67
    %v673 = vunpack.c.h.b16 %v67
    %v674 = vunpack.c.l.b16 %v68
    %v675 = vunpack.c.h.b16 %v68
    %v676 = vunpack.c.l.b16 %v69
    %v677 = vunpack.c.h.b16 %v69
    %v678 = vunpack.c.l.b16 %v70
    %v679 = vunpack.c.h.b16 %v70
    %v680 = vunpack.c.l.b16 %v71
    %v681 = vunpack.c.h.b16 %v71
    %v682 = vunpack.c.l.b16 %v72
    %v683 = vunpack.c.h.b16 %v72
    %v684 = vunpack.c.l.b16 %v73
    %v685 = vunpack.c.h.b16 %v73
    %v686 = vunpack.c.l.b16 %v74
    %v687 = vunpack.c.h.b16 %v74
    %v688 = vunpack.c.l.b16 %v75
    %v689 = vunpack.c.h.b16 %v75
    %v690 = vunpack.c.l.b16 %v76
    %v691 = vunpack.c.h.b16 %v76
    %v692 = vunpack.c.l.b16 %v77
    %v693 = vunpack.c.h.b16 %v77
    %v694 = vunpack.c.l.b16 %v78
    %v695 = vunpack.c.h.b16 %v78
    %v696 = vunpack.c.l.b16 %v79
    %v697 = vunpack.c.h.b16 %v79
    %v698 = vunpack.c.l.b16 %v80
    %v699 = vunpack.c.h.b16 %v80
    %v700 = vunpack.c.l.b16 %v81
    %v701 = vunpack.c.h.b16 %v81
    %v702 = vunpack.c.l.b16 %v82
    %v703 = vunpack.c.h.b16 %v82
    %v704 = vunpack.c.l.b16 %v83
    %v705 = vunpack.c.h.b16 %v83
    %v706 = vunpack.c.l.b16 %v84
    %v707 = vunpack.c.h.b16 %v84
    %v708 = vunpack.c.l.b16 %v85
    %v709 = vunpack.c.h.b16 %v85
    %v710 = vunpack.c.l.b16 %v86
    %v711 = vunpack.c.h.b16 %v86
    %v712 = vunpack.c.l.b16 %v87
    %v713 = vunpack.c.h.b16 %v87
    %v714 = vunpack.c.l.b16 %v88
    %v715 = vunpack.c.h.b16 %v88
    %v716 = vunpack.c.l.b16 %v89
    %v717 = vunpack.c.h.b16 %v89
    %v718 = vunpack.c.l.b16 %v90
    %v719 = vunpack.c.h.b16 %v90
    %v720 = vunpack.c.l.b16 %v91
    %v721 = vunpack.c.h.b16 %v91
    %v722 = vunpack.c.l.b16 %v92
    %v723 = vunpack.c.h.b16 %v92
    %v724 = vunpack.c.l.b16 %v93
    %v725 = vunpack.c.h.b16 %v93
    %v726 = vunpack.c.l.b16 %v94
    %v727 = vunpack.c.h.b16 %v94
    %v728 = vunpack.c.l.b16 %v95
    %v729 = vunpack.c.h.b16 %v95
    %v730 = vunpack.c.l.b16 %v96
    %v731 = vunpack.c.h.b16 %v96
    %v732 = vunpack.c.l.b16 %v97
    %v733 = vunpack.c.h.b16 %v97
    %v734 = vunpack.c.l.b16 %v98
    %v735 = vunpack.c.h.b16 %v98
    %v736 = vunpack.c.l.b16 %v99
    %v737 = vunpack.c.h.b16 %v99
    %v738 = vunpack.c.l.b16 %v100
    %v739 = vunpack.c.h.b16 %v100
    %v740 = vunpack.c.l.b16 %v101
    %v741 = vunpack.c.h.b16 %v101
    %v742 = vunpack.c.l.b16 %v102
    %v743 = vunpack.c.h.b16 %v102
    %v744 = vunpack.c.l.b16 %v103
    %v745 = vunpack.c.h.b16 %v103
    %v746 = vunpack.c.l.b16 %v104
    %v747 = vunpack.c.h.b16 %v104
    %v748 = vunpack.c.l.b16 %v105
    %v749 = vunpack.c.h.b16 %v105
    %v750 = vunpack.c.l.b16 %v106
    %v751 = vunpack.c.h.b16 %v106
    %v752 = vunpack.c.l.b16 %v107
    %v753 = vunpack.c.h.b16 %v107
    %v754 = vunpack.c.l.b16 %v108
    %v755 = vunpack.c.h.b16 %v108
    %v756 = vunpack.c.l.b16 %v109
    %v757 = vunpack.c.h.b16 %v109
    %v758 = vunpack.c.l.b16 %v110
    %v759 = vunpack.c.h.b16 %v110
    %v760 = vunpack.c.l.b16 %v111
    %v761 = vunpack.c.h.b16 %v111
    %v762 = vunpack.c.l.b16 %v112
    %v763 = vunpack.c.h.b16 %v112
    %v764 = vunpack.c.l.b16 %v113
    %v765 = vunpack.c.h.b16 %v113
    %v766 = vunpack.c.l.b16 %v114
    %v767 = vunpack.c.h.b16 %v114
    %v768 = vunpack.c.l.b16 %v115
    %v769 = vunpack.c.h.b16 %v115
    %v770 = vunpack.c.l.b16 %v116
    %v771 = vunpack.c.h.b16 %v116
    %v772 = vunpack.c.l.b16 %v117
    %v773 = vunpack.c.h.b16 %v117
    %v774 = vunpack.c.l.b16 %v118
    %v775 = vunpack.c.h.b16 %v118
    %v776 = vunpack.c.l.b16 %v119
    %v777 = vunpack.c.h.b16 %v119
    %v778 = vunpack.c.l.b16 %v120
    %v779 = vunpack.c.h.b16 %v120
    %v780 = vunpack.c.l.b16 %v121
    %v781 = vunpack.c.h.b16 %v121
    %v782 = vunpack.c.l.b16 %v122
    %v783 = vunpack.c.h.b16 %v122
    %v784 = vunpack.c.l.b16 %v123
    %v785 = vunpack.c.h.b16 %v123
    %v786 = vunpack.c.l.b16 %v124
    %v787 = vunpack.c.h.b16 %v124
    %v788 = vunpack.c.l.b16 %v125
    %v789 = vunpack.c.h.b16 %v125
    %v790 = vunpack.c.l.b16 %v126
    %v791 = vunpack.c.h.b16 %v126
    %v792 = vunpack.c.l.b16 %v127
    %v793 = vunpack.c.h.b16 %v127
    %v794 = vunpack.c.l.b16 %v128
    %v795 = vunpack.c.h.b16 %v128
    %v796 = vunpack.c.l.b16 %v129
    %v797 = vunpack.c.h.b16 %v129
    %v798 = vunpack.c.l.b16 %v130
    %v799 = vunpack.c.h.b16 %v130
    %v800 = vunpack.c.l.b16 %v131
    %v801 = vunpack.c.h.b16 %v131
    %v802 = vunpack.c.l.b16 %v132
    %v803 = vunpack.c.h.b16 %v132
    %v804 = vunpack.c.l.b16 %v133
    %v805 = vunpack.c.h.b16 %v133
    %v806 = vunpack.c.l.b16 %v134
    %v807 = vunpack.c.h.b16 %v134
    %v808 = vunpack.c.l.b16 %v135
    %v809 = vunpack.c.h.b16 %v135
    %v810 = vunpack.c.l.b16 %v136
    %v811 = vunpack.c.h.b16 %v136
    %v812 = vunpack.c.l.b16 %v137
    %v813 = vunpack.c.h.b16 %v137
    %v814 = vunpack.c.l.b16 %v138
    %v815 = vunpack.c.h.b16 %v138
    %v816 = vunpack.c.l.b16 %v139
    %v817 = vunpack.c.h.b16 %v139
    %v818 = vunpack.c.l.b16 %v140
    %v819 = vunpack.c.h.b16 %v140
    %v820 = vunpack.c.l.b16 %v141
    %v821 = vunpack.c.h.b16 %v141
    %v822 = vunpack.c.l.b16 %v142
    %v823 = vunpack.c.h.b16 %v142
    %v824 = vunpack.c.l.b16 %v143
    %v825 = vunpack.c.h.b16 %v143
    %v826 = vunpack.c.l.b16 %v144
    %v827 = vunpack.c.h.b16 %v144
    %v828 = vunpack.c.l.b16 %v145
    %v829 = vunpack.c.h.b16 %v145
    %v830 = vunpack.c.l.b16 %v146
    %v831 = vunpack.c.h.b16 %v146
    %v832 = vunpack.c.l.b16 %v147
    %v833 = vunpack.c.h.b16 %v147
    %v834 = vunpack.c.l.b16 %v148
    %v835 = vunpack.c.h.b16 %v148
    %v836 = vunpack.c.l.b16 %v149
    %v837 = vunpack.c.h.b16 %v149
    %v838 = vunpack.c.l.b16 %v150
    %v839 = vunpack.c.h.b16 %v150
    %v840 = vunpack.c.l.b16 %v151
    %v841 = vunpack.c.h.b16 %v151
    %v842 = vunpack.c.l.b16 %v152
    %v843 = vunpack.c.h.b16 %v152
    %v844 = vunpack.c.l.b16 %v153
    %v845 = vunpack.c.h.b16 %v153
    %v846 = vunpack.c.l.b16 %v154
    %v847 = vunpack.c.h.b16 %v154
    %v848 = vunpack.c.l.b16 %v155
    %v849 = vunpack.c.h.b16 %v155
    %v850 = vunpack.c.l.b16 %v156
    %v851 = vunpack.c.h.b16 %v156
    %v852 = vunpack.c.l.b16 %v157
    %v853 = vunpack.c.h.b16 %v157
    %v854 = vunpack.c.l.b16 %v158
    %v855 = vunpack.c.h.b16 %v158
    %v856 = vunpack.c.l.b16 %v159
    %v857 = vunpack.c.h.b16 %v159
    %v858 = vunpack.c.l.b16 %v160
    %v859 = vunpack.c.h.b16 %v160
    %v860 = vunpack.c.l.b16 %v161
    %v861 = vunpack.c.h.b16 %v161
    %v862 = vunpack.c.l.b16 %v162
    %v863 = vunpack.c.h.b16 %v162
    %v864 = vunpack.c.l.b16 %v163
    %v865 = vunpack.c.h.b16 %v163
    %v866 = vunpack.c.l.b16 %v164
    %v867 = vunpack.c.h.b16 %v164
    %v868 = vunpack.c.l.b16 %v165
    %v869 = vunpack.c.h.b16 %v165
    %v870 = vunpack.c.l.b16 %v166
    %v871 = vunpack.c.h.b16 %v166
    %v872 = vunpack.c.l.b16 %v167
    %v873 = vunpack.c.h.b16 %v167
    %v874 = vunpack.c.l.b16 %v168
    %v875 = vunpack.c.h.b16 %v168
    %v876 = vunpack.c.l.b16 %v169
    %v877 = vunpack.c.h.b16 %v169
    %v878 = vunpack.c.l.b16 %v170
    %v879 = vunpack.c.h.b16 %v170
    %v880 = vunpack.c.l.b16 %v171
    %v881 = vunpack.c.h.b16 %v171
    %v882 = vunpack.c.l.b16 %v172
    %v883 = vunpack.c.h.b16 %v172
    %v884 = vunpack.c.l.b16 %v173
    %v885 = vunpack.c.h.b16 %v173
    %v886 = vunpack.c.l.b16 %v174
    %v887 = vunpack.c.h.b16 %v174
    %v888 = vunpack.c.l.b16 %v175
    %v889 = vunpack.c.h.b16 %v175
    %v890 = vunpack.c.l.b16 %v176
    %v891 = vunpack.c.h.b16 %v176
    %v892 = vunpack.c.l.b16 %v177
    %v893 = vunpack.c.h.b16 %v177
    %v894 = vunpack.c.l.b16 %v178
    %v895 = vunpack.c.h.b16 %v178
    %v896 = vunpack.c.l.b16 %v179
    %v897 = vunpack.c.h.b16 %v179
    %v898 = vunpack.c.l.b16 %v180
    %v899 = vunpack.c.h.b16 %v180
    %v900 = vunpack.c.l.b16 %v181
    %v901 = vunpack.c.h.b16 %v181
    %v902 = vunpack.c.l.b16 %v182
    %v903 = vunpack.c.h.b16 %v182
    %v904 = vunpack.c.l.b16 %v183
    %v905 = vunpack.c.h.b16 %v183
    %v906 = vunpack.c.l.b16 %v184
    %v907 = vunpack.c.h.b16 %v184
    %v908 = vunpack.c.l.b16 %v185
    %v909 = vunpack.c.h.b16 %v185
    %v910 = vunpack.c.l.b16 %v186
    %v911 = vunpack.c.h.b16 %v186
    %v912 = vunpack.c.l.b16 %v187
    %v913 = vunpack.c.h.b16 %v187
    %v914 = vunpack.c.l.b16 %v188
    %v915 = vunpack.c.h.b16 %v188
    %v916 = vunpack.c.l.b16 %v189
    %v917 = vunpack.c.h.b16 %v189
    %v918 = vunpack.c.l.b16 %v190
    %v919 = vunpack.c.h.b16 %v190
    %v920 = vunpack.c.l.b16 %v191
    %v921 = vunpack.c.h.b16 %v191
    %v922 = vunpack.c.l.b16 %v192
    %v923 = vunpack.c.h.b16 %v192
    %v924 = vunpack.c.l.b16 %v193
    %v925 = vunpack.c.h.b16 %v193
    %v926 = vunpack.c.l.b16 %v194
    %v927 = vunpack.c.h.b16 %v194
    %v928 = vunpack.c.l.b16 %v195
    %v929 = vunpack.c.h.b16 %v195
    %v930 = vunpack.c.l.b16 %v196
    %v931 = vunpack.c.h.b16 %v196
    %v932 = vunpack.c.l.b16 %v197
    %v933 = vunpack.c.h.b16 %v197
    %v934 = vunpack.c.l.b16 %v198
    %v935 = vunpack.c.h.b16 %v198
    %v936 = vunpack.c.l.b16 %v199
    %v937 = vunpack.c.h.b16 %v199
    %v938 = vunpack.c.l.b16 %v200
    %v939 = vunpack.c.h.b16 %v200
    %v940 = vunpack.c.l.b16 %v201
    %v941 = vunpack.c.h.b16 %v201
    %v942 = vunpack.c.l.b16 %v202
    %v943 = vunpack.c.h.b16 %v202
    %v944 = vunpack.c.l.b16 %v203
    %v945 = vunpack.c.h.b16 %v203
    %v946 = vunpack.c.l.b16 %v204
    %v947 = vunpack.c.h.b16 %v204
    %v948 = vunpack.c.l.b16 %v205
    %v949 = vunpack.c.h.b16 %v205
    %v950 = vunpack.c.l.b16 %v206
    %v951 = vunpack.c.h.b16 %v206
    %v952 = vunpack.c.l.b16 %v207
    %v953 = vunpack.c.h.b16 %v207
    %v954 = vunpack.c.l.b16 %v208
    %v955 = vunpack.c.h.b16 %v208
    %v956 = vunpack.c.l.b16 %v209
    %v957 = vunpack.c.h.b16 %v209
    %v958 = vunpack.c.l.b16 %v210
    %v959 = vunpack.c.h.b16 %v210
    %v960 = vunpack.c.l.b16 %v211
    %v961 = vunpack.c.h.b16 %v211
    %v962 = vunpack.c.l.b16 %v212
    %v963 = vunpack.c.h.b16 %v212
    %v964 = vunpack.c.l.b16 %v213
    %v965 = vunpack.c.h.b16 %v213
    %v966 = vunpack.c.l.b16 %v214
    %v967 = vunpack.c.h.b16 %v214
    %v968 = vunpack.c.l.b16 %v215
    %v969 = vunpack.c.h.b16 %v215
    %v970 = vunpack.c.l.b16 %v216
    %v971 = vunpack.c.h.b16 %v216
    %v972 = vunpack.c.l.b16 %v217
    %v973 = vunpack.c.h.b16 %v217
    %v974 = vunpack.c.l.b16 %v218
    %v975 = vunpack.c.h.b16 %v218
    %v976 = vunpack.c.l.b16 %v219
    %v977 = vunpack.c.h.b16 %v219
    %v978 = vunpack.c.l.b16 %v220
    %v979 = vunpack.c.h.b16 %v220
    %v980 = vunpack.c.l.b16 %v221
    %v981 = vunpack.c.h.b16 %v221
    %v982 = vunpack.c.l.b16 %v222
    %v983 = vunpack.c.h.b16 %v222
    %v984 = vunpack.c.l.b16 %v223
    %v985 = vunpack.c.h.b16 %v223
    %v986 = vunpack.c.l.b16 %v224
    %v987 = vunpack.c.h.b16 %v224
    %v988 = vunpack.c.l.b16 %v225
    %v989 = vunpack.c.h.b16 %v225
    %v990 = vunpack.c.l.b16 %v226
    %v991 = vunpack.c.h.b16 %v226
    %v992 = vunpack.c.l.b16 %v227
    %v993 = vunpack.c.h.b16 %v227
    %v994 = vunpack.c.l.b16 %v228
    %v995 = vunpack.c.h.b16 %v228
    %v996 = vunpack.c.l.b16 %v229
    %v997 = vunpack.c.h.b16 %v229
    %v998 = vunpack.c.l.b16 %v230
    %v999 = vunpack.c.h.b16 %v230
    %v1000 = vunpack.c.l.b16 %v231
    %v1001 = vunpack.c.h.b16 %v231
    %v1002 = vunpack.c.l.b16 %v232
    %v1003 = vunpack.c.h.b16 %v232
    %v1004 = vunpack.c.l.b16 %v233
    %v1005 = vunpack.c.h.b16 %v233
    %v1006 = vunpack.c.l.b16 %v234
    %v1007 = vunpack.c.h.b16 %v234
    %v1008 = vunpack.c.l.b16 %v235
    %v1009 = vunpack.c.h.b16 %v235
    %v1010 = vunpack.c.l.b16 %v236
    %v1011 = vunpack.c.h.b16 %v236
    %v1012 = vunpack.c.l.b16 %v237
    %v1013 = vunpack.c.h.b16 %v237
    %v1014 = vunpack.c.l.b16 %v238
    %v1015 = vunpack.c.h.b16 %v238
    %v1016 = vunpack.c.l.b16 %v239
    %v1017 = vunpack.c.h.b16 %v239
    %v1018 = vunpack.c.l.b16 %v240
    %v1019 = vunpack.c.h.b16 %v240
    %v1020 = vunpack.c.l.b16 %v241
    %v1021 = vunpack.c.h.b16 %v241
    %v1022 = vunpack.c.l.b16 %v242
    %v1023 = vunpack.c.h.b16 %v242
    %v1024 = vunpack.c.l.b16 %v243
    %v1025 = vunpack.c.h.b16 %v243
    %v1026 = vunpack.c.l.b16 %v244
    %v1027 = vunpack.c.h.b16 %v244
    %v1028 = vunpack.c.l.b16 %v245
    %v1029 = vunpack.c.h.b16 %v245
    %v1030 = vunpack.c.l.b16 %v246
    %v1031 = vunpack.c.h.b16 %v246
    %v1032 = vunpack.c.l.b16 %v247
    %v1033 = vunpack.c.h.b16 %v247
    %v1034 = vunpack.c.l.b16 %v248
    %v1035 = vunpack.c.h.b16 %v248
    %v1036 = vunpack.c.l.b16 %v249
    %v1037 = vunpack.c.h.b16 %v249
    %v1038 = vunpack.c.l.b16 %v250
    %v1039 = vunpack.c.h.b16 %v250
    %v1040 = vunpack.c.l.b16 %v251
    %v1041 = vunpack.c.h.b16 %v251
    %v1042 = vunpack.c.l.b16 %v252
    %v1043 = vunpack.c.h.b16 %v252
    %v1044 = vunpack.c.l.b16 %v253
    %v1045 = vunpack.c.h.b16 %v253
    %v1046 = vunpack.c.l.b16 %v254
    %v1047 = vunpack.c.h.b16 %v254
    %v1048 = vunpack.c.l.b16 %v255
    %v1049 = vunpack.c.h.b16 %v255
    %v1050 = vunpack.c.l.b16 %v256
    %v1051 = vunpack.c.h.b16 %v256
    %v1052 = vunpack.c.l.b16 %v257
    %v1053 = vunpack.c.h.b16 %v257
    %v1054 = vunpack.c.l.b16 %v258
    %v1055 = vunpack.c.h.b16 %v258
    %v1056 = vunpack.c.l.b16 %v259
    %v1057 = vunpack.c.h.b16 %v259
    %v1058 = vunpack.c.l.b16 %v260
    %v1059 = vunpack.c.h.b16 %v260
    %v1060 = vunpack.c.l.b16 %v261
    %v1061 = vunpack.c.h.b16 %v261
    %v1062 = vunpack.c.l.b16 %v262
    %v1063 = vunpack.c.h.b16 %v262
    %v1064 = vunpack.c.l.b16 %v263
    %v1065 = vunpack.c.h.b16 %v263
    %v1066 = vunpack.c.l.b16 %v264
    %v1067 = vunpack.c.h.b16 %v264
    %v1068 = vunpack.c.l.b16 %v265
    %v1069 = vunpack.c.h.b16 %v265
    %v1070 = vunpack.c.l.b16 %v266
    %v1071 = vunpack.c.h.b16 %v266
    %v1072 = vunpack.c.l.b16 %v267
    %v1073 = vunpack.c.h.b16 %v267
    %v1074 = vunpack.c.l.b16 %v268
    %v1075 = vunpack.c.h.b16 %v268
    %v1076 = vunpack.c.l.b16 %v269
    %v1077 = vunpack.c.h.b16 %v269
    %v1078 = vunpack.c.l.b16 %v270
    %v1079 = vunpack.c.h.b16 %v270
    %v1080 = vunpack.c.l.b16 %v271
    %v1081 = vunpack.c.h.b16 %v271
    %v1082 = vunpack.c.l.b16 %v272
    %v1083 = vunpack.c.h.b16 %v272
    %v1084 = vunpack.c.l.b16 %v273
    %v1085 = vunpack.c.h.b16 %v273
    %v1086 = vunpack.c.l.b16 %v274
    %v1087 = vunpack.c.h.b16 %v274
    %v1088 = vunpack.c.l.b16 %v275
    %v1089 = vunpack.c.h.b16 %v275
    %v1090 = vunpack.c.l.b16 %v276
    %v1091 = vunpack.c.h.b16 %v276
    %v1092 = vunpack.c.l.b16 %v277
    %v1093 = vunpack.c.h.b16 %v277
    %v1094 = vunpack.c.l.b16 %v278
    %v1095 = vunpack.c.h.b16 %v278
    %v1096 = vunpack.c.l.b16 %v279
    %v1097 = vunpack.c.h.b16 %v279
    %v1098 = vunpack.c.l.b16 %v280
    %v1099 = vunpack.c.h.b16 %v280
    %v1100 = vunpack.c.l.b16 %v281
    %v1101 = vunpack.c.h.b16 %v281
    %v1102 = vunpack.c.l.b16 %v282
    %v1103 = vunpack.c.h.b16 %v282
    %v1104 = vunpack.c.l.b16 %v283
    %v1105 = vunpack.c.h.b16 %v283
    %v1106 = vunpack.c.l.b16 %v284
    %v1107 = vunpack.c.h.b16 %v284
    %v1108 = vunpack.c.l.b16 %v285
    %v1109 = vunpack.c.h.b16 %v285
    %v1110 = vunpack.c.l.b16 %v286
    %v1111 = vunpack.c.h.b16 %v286
    %v1112 = vunpack.c.l.b16 %v287
    %v1113 = vunpack.c.h.b16 %v287
    %v1114 = vunpack.c.l.b16 %v288
    %v1115 = vunpack.c.h.b16 %v288
    %v1116 = vunpack.c.l.b16 %v289
    %v1117 = vunpack.c.h.b16 %v289
    %v1118 = vunpack.c.l.b16 %v290
    %v1119 = vunpack.c.h.b16 %v290
    %v1120 = vunpack.c.l.b16 %v291
    %v1121 = vunpack.c.h.b16 %v291
    %v1122 = vunpack.c.l.b16 %v292
    %v1123 = vunpack.c.h.b16 %v292
    %v1124 = vunpack.c.l.b16 %v293
    %v1125 = vunpack.c.h.b16 %v293
    %v1126 = vunpack.c.l.b16 %v294
    %v1127 = vunpack.c.h.b16 %v294
    %v1128 = vunpack.c.l.b16 %v295
    %v1129 = vunpack.c.h.b16 %v295
    %v1130 = vunpack.c.l.b16 %v296
    %v1131 = vunpack.c.h.b16 %v296
    %v1132 = vunpack.c.l.b16 %v297
    %v1133 = vunpack.c.h.b16 %v297
    %v1134 = vunpack.c.l.b16 %v298
    %v1135 = vunpack.c.h.b16 %v298
    %v1136 = vunpack.c.l.b16 %v299
    %v1137 = vunpack.c.h.b16 %v299
    %v1138 = vunpack.c.l.b16 %v300
    %v1139 = vunpack.c.h.b16 %v300
    %v1140 = vunpack.c.l.b16 %v301
    %v1141 = vunpack.c.h.b16 %v301
    %v1142 = vunpack.c.l.b16 %v302
    %v1143 = vunpack.c.h.b16 %v302
    %v1144 = vunpack.c.l.b16 %v303
    %v1145 = vunpack.c.h.b16 %v303
    %v1146 = vunpack.c.l.b16 %v304
    %v1147 = vunpack.c.h.b16 %v304
    %v1148 = vunpack.c.l.b16 %v305
    %v1149 = vunpack.c.h.b16 %v305
    %v1150 = vunpack.c.l.b16 %v306
    %v1151 = vunpack.c.h.b16 %v306
    %v1152 = vunpack.c.l.b16 %v307
    %v1153 = vunpack.c.h.b16 %v307
    %v1154 = vunpack.c.l.b16 %v308
    %v1155 = vunpack.c.h.b16 %v308
    %v1156 = vunpack.c.l.b16 %v309
    %v1157 = vunpack.c.h.b16 %v309
    %v1158 = vunpack.c.l.b16 %v310
    %v1159 = vunpack.c.h.b16 %v310
    %v1160 = vunpack.c.l.b16 %v311
    %v1161 = vunpack.c.h.b16 %v311
    %v1162 = vunpack.c.l.b16 %v312
    %v1163 = vunpack.c.h.b16 %v312
    %v1164 = vunpack.c.l.b16 %v313
    %v1165 = vunpack.c.h.b16 %v313
    %v1166 = vunpack.c.l.b16 %v314
    %v1167 = vunpack.c.h.b16 %v314
    %v1168 = vunpack.c.l.b16 %v315
    %v1169 = vunpack.c.h.b16 %v315
    %v1170 = vunpack.c.l.b16 %v316
    %v1171 = vunpack.c.h.b16 %v316
    %v1172 = vunpack.c.l.b16 %v317
    %v1173 = vunpack.c.h.b16 %v317
    %v1174 = vunpack.c.l.b16 %v318
    %v1175 = vunpack.c.h.b16 %v318
    %v1176 = vunpack.c.l.b16 %v319
    %v1177 = vunpack.c.h.b16 %v319
    %v1178 = vunpack.c.l.b16 %v320
    %v1179 = vunpack.c.h.b16 %v320
    %v1180 = vunpack.c.l.b16 %v321
    %v1181 = vunpack.c.h.b16 %v321
    %v1182 = vunpack.c.l.b16 %v322
    %v1183 = vunpack.c.h.b16 %v322
    %v1184 = vunpack.c.l.b16 %v323
    %v1185 = vunpack.c.h.b16 %v323
    %v1186 = vunpack.c.l.b16 %v324
    %v1187 = vunpack.c.h.b16 %v324
    %v1188 = vunpack.c.l.b16 %v325
    %v1189 = vunpack.c.h.b16 %v325
    %v1190 = vpack.c.b16 %v632, %v614
    %v1191 = vpack.c.b16 %v633, %v615
    %v1192 = vpack.c.b16 %v634, %v616
    %v1193 = vpack.c.b16 %v635, %v617
    %v1194 = vpack.c.b16 %v636, %v618
    %v1195 = vpack.c.b16 %v637, %v619
    %v1196 = vpack.c.b16 %v638, %v620
    %v1197 = vpack.c.b16 %v639, %v621
    %v1198 = vpack.c.b16 %v640, %v622
    %v1199 = vpack.c.b16 %v641, %v623
    %v1200 = vpack.c.b16 %v642, %v624
    %v1201 = vpack.c.b16 %v643, %v625
    %v1202 = vpack.c.b16 %v644, %v626
    %v1203 = vpack.c.b16 %v645, %v627
    %v1204 = vpack.c.b16 %v646, %v628
    %v1205 = vpack.c.b16 %v647, %v629
    %v1206 = vpack.c.b16 %v648, %v630
    %v1207 = vpack.c.b16 %v649, %v631
    %v1208 = vpack.c.b16 %v668, %v650
    %v1209 = vpack.c.b16 %v669, %v651
    %v1210 = vpack.c.b16 %v670, %v652
    %v1211 = vpack.c.b16 %v671, %v653
    %v1212 = vpack.c.b16 %v672, %v654
    %v1213 = vpack.c.b16 %v673, %v655
    %v1214 = vpack.c.b16 %v674, %v656
    %v1215 = vpack.c.b16 %v675, %v657
    %v1216 = vpack.c.b16 %v676, %v658
    %v1217 = vpack.c.b16 %v677, %v659
    %v1218 = vpack.c.b16 %v678, %v660
    %v1219 = vpack.c.b16 %v679, %v661
    %v1220 = vpack.c.b16 %v680, %v662
    %v1221 = vpack.c.b16 %v681, %v663
    %v1222 = vpack.c.b16 %v682, %v664
    %v1223 = vpack.c.b16 %v683, %v665
    %v1224 = vpack.c.b16 %v684, %v666
    %v1225 = vpack.c.b16 %v685, %v667
    %v1226 = vpack.c.b16 %v704, %v686
    %v1227 = vpack.c.b16 %v705, %v687
    %v1228 = vpack.c.b16 %v706, %v688
    %v1229 = vpack.c.b16 %v707, %v689
    %v1230 = vpack.c.b16 %v708, %v690
    %v1231 = vpack.c.b16 %v709, %v691
    %v1232 = vpack.c.b16 %v710, %v692
    %v1233 = vpack.c.b16 %v711, %v693
    %v1234 = vpack.c.b16 %v712, %v694
    %v1235 = vpack.c.b16 %v713, %v695
    %v1236 = vpack.c.b16 %v714, %v696
    %v1237 = vpack.c.b16 %v715, %v697
    %v1238 = vpack.c.b16 %v716, %v698
    %v1239 = vpack.c.b16 %v717, %v699
    %v1240 = vpack.c.b16 %v718, %v700
    %v1241 = vpack.c.b16 %v719, %v701
    %v1242 = vpack.c.b16 %v720, %v702
    %v1243 = vpack.c.b16 %v721, %v703
    %v1244 = vpack.c.b16 %v740, %v722
    %v1245 = vpack.c.b16 %v741, %v723
    %v1246 = vpack.c.b16 %v742, %v724
    %v1247 = vpack.c.b16 %v743, %v725
    %v1248 = vpack.c.b16 %v744, %v726
    %v1249 = vpack.c.b16 %v745, %v727
    %v1250 = vpack.c.b16 %v746, %v728
    %v1251 = vpack.c.b16 %v747, %v729
    %v1252 = vpack.c.b16 %v748, %v730
    %v1253 = vpack.c.b16 %v749, %v731
    %v1254 = vpack.c.b16 %v750, %v732
    %v1255 = vpack.c.b16 %v751, %v733
    %v1256 = vpack.c.b16 %v752, %v734
    %v1257 = vpack.c.b16 %v753, %v735
    %v1258 = vpack.c.b16 %v754, %v736
    %v1259 = vpack.c.b16 %v755, %v737
    %v1260 = vpack.c.b16 %v756, %v738
    %v1261 = vpack.c.b16 %v757, %v739
    %v1262 = vpack.c.b16 %v776, %v758
    %v1263 = vpack.c.b16 %v777, %v759
    %v1264 = vpack.c.b16 %v778, %v760
    %v1265 = vpack.c.b16 %v779, %v761
    %v1266 = vpack.c.b16 %v780, %v762
    %v1267 = vpack.c.b16 %v781, %v763
    %v1268 = vpack.c.b16 %v782, %v764
    %v1269 = vpack.c.b16 %v783, %v765
    %v1270 = vpack.c.b16 %v784, %v766
    %v1271 = vpack.c.b16 %v785, %v767
    %v1272 = vpack.c.b16 %v786, %v768
    %v1273 = vpack.c.b16 %v787, %v769
    %v1274 = vpack.c.b16 %v788, %v770
    %v1275 = vpack.c.b16 %v789, %v771
    %v1276 = vpack.c.b16 %v790, %v772
    %v1277 = vpack.c.b16 %v791, %v773
    %v1278 = vpack.c.b16 %v792, %v774
    %v1279 = vpack.c.b16 %v793, %v775
    %v1280 = vpack.c.b16 %v812, %v794
    %v1281 = vpack.c.b16 %v813, %v795
    %v1282 = vpack.c.b16 %v814, %v796
    %v1283 = vpack.c.b16 %v815, %v797
    %v1284 = vpack.c.b16 %v816, %v798
    %v1285 = vpack.c.b16 %v817, %v799
    %v1286 = vpack.c.b16 %v818, %v800
    %v1287 = vpack.c.b16 %v819, %v801
    %v1288 = vpack.c.b16 %v820, %v802
    %v1289 = vpack.c.b16 %v821, %v803
    %v1290 = vpack.c.b16 %v822, %v804
    %v1291 = vpack.c.b16 %v823, %v805
    %v1292 = vpack.c.b16 %v824, %v806
    %v1293 = vpack.c.b16 %v825, %v807
    %v1294 = vpack.c.b16 %v826, %v808
    %v1295 = vpack.c.b16 %v827, %v809
    %v1296 = vpack.c.b16 %v828, %v810
    %v1297 = vpack.c.b16 %v829, %v811
    %v1298 = vpack.c.b16 %v848, %v830
    %v1299 = vpack.c.b16 %v849, %v831
    %v1300 = vpack.c.b16 %v850, %v832
    %v1301 = vpack.c.b16 %v851, %v833
    %v1302 = vpack.c.b16 %v852, %v834
    %v1303 = vpack.c.b16 %v853, %v835
    %v1304 = vpack.c.b16 %v854, %v836
    %v1305 = vpack.c.b16 %v855, %v837
    %v1306 = vpack.c.b16 %v856, %v838
    %v1307 = vpack.c.b16 %v857, %v839
    %v1308 = vpack.c.b16 %v858, %v840
    %v1309 = vpack.c.b16 %v859, %v841
    %v1310 = vpack.c.b16 %v860, %v842
    %v1311 = vpack.c.b16 %v861, %v843
    %v1312 = vpack.c.b16 %v862, %v844
    %v1313 = vpack.c.b16 %v863, %v845
    %v1314 = vpack.c.b16 %v864, %v846
    %v1315 = vpack.c.b16 %v865, %v847
    %v1316 = vpack.c.b16 %v884, %v866
    %v1317 = vpack.c.b16 %v885, %v867
    %v1318 = vpack.c.b16 %v886, %v868
    %v1319 = vpack.c.b16 %v887, %v869
    %v1320 = vpack.c.b16 %v888, %v870
    %v1321 = vpack.c.b16 %v889, %v871
    %v1322 = vpack.c.b16 %v890, %v872
    %v1323 = vpack.c.b16 %v891, %v873
    %v1324 = vpack.c.b16 %v892, %v874
    %v1325 = vpack.c.b16 %v893, %v875
    %v1326 = vpack.c.b16 %v894, %v876
    %v1327 = vpack.c.b16 %v895, %v877
    %v1328 = vpack.c.b16 %v896, %v878
    %v1329 = vpack.c.b16 %v897, %v879
    %v1330 = vpack.c.b16 %v898, %v880
    %v1331 = vpack.c.b16 %v899, %v881
    %v1332 = vpack.c.b16 %v900, %v882
    %v1333 = vpack.c.b16 %v901, %v883
    %v1334 = vpack.c.b16 %v920, %v902
    %v1335 = vpack.c.b16 %v921, %v903
    %v1336 = vpack.c.b16 %v922, %v904
    %v1337 = vpack.c.b16 %v923, %v905
    %v1338 = vpack.c.b16 %v924, %v906
    %v1339 = vpack.c.b16 %v925, %v907
    %v1340 = vpack.c.b16 %v926, %v908
    %v1341 = vpack.c.b16 %v927, %v909
    %v1342 = vpack.c.b16 %v928, %v910
    %v1343 = vpack.c.b16 %v929, %v911
    %v1344 = vpack.c.b16 %v930, %v912
    %v1345 = vpack.c.b16 %v931, %v913
    %v1346 = vpack.c.b16 %v932, %v914
    %v1347 = vpack.c.b16 %v933, %v915
    %v1348 = vpack.c.b16 %v934, %v916
    %v1349 = vpack.c.b16 %v935, %v917
    %v1350 = vpack.c.b16 %v936, %v918
    %v1351 = vpack.c.b16 %v937, %v919
    %v1352 = vpack.c.b16 %v956, %v938
    %v1353 = vpack.c.b16 %v957, %v939
    %v1354 = vpack.c.b16 %v958, %v940
    %v1355 = vpack.c.b16 %v959, %v941
    %v1356 = vpack.c.b16 %v960, %v942
    %v1357 = vpack.c.b16 %v961, %v943
    %v1358 = vpack.c.b16 %v962, %v944
    %v1359 = vpack.c.b16 %v963, %v945
    %v1360 = vpack.c.b16 %v964, %v946
    %v1361 = vpack.c.b16 %v965, %v947
    %v1362 = vpack.c.b16 %v966, %v948
    %v1363 = vpack.c.b16 %v967, %v949
    %v1364 = vpack.c.b16 %v968, %v950
    %v1365 = vpack.c.b16 %v969, %v951
    %v1366 = vpack.c.b16 %v970, %v952
    %v1367 = vpack.c.b16 %v971, %v953
    %v1368 = vpack.c.b16 %v972, %v954
    %v1369 = vpack.c.b16 %v973, %v955
    %v1370 = vpack.c.b16 %v992, %v974
    %v1371 = vpack.c.b16 %v993, %v975
    %v1372 = vpack.c.b16 %v994, %v976
    %v1373 = vpack.c.b16 %v995, %v977
    %v1374 = vpack.c.b16 %v996, %v978
    %v1375 = vpack.c.b16 %v997, %v979
    %v1376 = vpack.c.b16 %v998, %v980
    %v1377 = vpack.c.b16 %v999, %v981
    %v1378 = vpack.c.b16 %v1000, %v982
    %v1379 = vpack.c.b16 %v1001, %v983
    %v1380 = vpack.c.b16 %v1002, %v984
    %v1381 = vpack.c.b16 %v1003, %v985
    %v1382 = vpack.c.b16 %v1004, %v986
    %v1383 = vpack.c.b16 %v1005, %v987
    %v1384 = vpack.c.b16 %v1006, %v988
    %v1385 = vpack.c.b16 %v1007, %v989
    %v1386 = vpack.c.b16 %v1008, %v990
    %v1387 = vpack.c.b16 %v1009, %v991
    %v1388 = vpack.c.b16 %v1028, %v1010
    %v1389 = vpack.c.b16 %v1029, %v1011
    %v1390 = vpack.c.b16 %v1030, %v1012
    %v1391 = vpack.c.b16 %v1031, %v1013
    %v1392 = vpack.c.b16 %v1032, %v1014
    %v1393 = vpack.c.b16 %v1033, %v1015
    %v1394 = vpack.c.b16 %v1034, %v1016
    %v1395 = vpack.c.b16 %v1035, %v1017
    %v1396 = vpack.c.b16 %v1036, %v1018
    %v1397 = vpack.c.b16 %v1037, %v1019
    %v1398 = vpack.c.b16 %v1038, %v1020
    %v1399 = vpack.c.b16 %v1039, %v1021
    %v1400 = vpack.c.b16 %v1040, %v1022
    %v1401 = vpack.c.b16 %v1041, %v1023
    %v1402 = vpack.c.b16 %v1042, %v1024
    %v1403 = vpack.c.b16 %v1043, %v1025
    %v1404 = vpack.c.b16 %v1044, %v1026
    %v1405 = vpack.c.b16 %v1045, %v1027
    %v1406 = vpack.c.b16 %v1064, %v1046
    %v1407 = vpack.c.b16 %v1065, %v1047
    %v1408 = vpack.c.b16 %v1066, %v1048
    %v1409 = vpack.c.b16 %v1067, %v1049
    %v1410 = vpack.c.b16 %v1068, %v1050
    %v1411 = vpack.c.b16 %v1069, %v1051
    %v1412 = vpack.c.b16 %v1070, %v1052
    %v1413 = vpack.c.b16 %v1071, %v1053
    %v1414 = vpack.c.b16 %v1072, %v1054
    %v1415 = vpack.c.b16 %v1073, %v1055
    %v1416 = vpack.c.b16 %v1074, %v1056
    %v1417 = vpack.c.b16 %v1075, %v1057
    %v1418 = vpack.c.b16 %v1076, %v1058
    %v1419 = vpack.c.b16 %v1077, %v1059
    %v1420 = vpack.c.b16 %v1078, %v1060
    %v1421 = vpack.c.b16 %v1079, %v1061
    %v1422 = vpack.c.b16 %v1080, %v1062
    %v1423 = vpack.c.b16 %v1081, %v1063
    %v1424 = vpack.c.b16 %v1100, %v1082
    %v1425 = vpack.c.b16 %v1101, %v1083
    %v1426 = vpack.c.b16 %v1102, %v1084
    %v1427 = vpack.c.b16 %v1103, %v1085
    %v1428 = vpack.c.b16 %v1104, %v1086
    %v1429 = vpack.c.b16 %v1105, %v1087
    %v1430 = vpack.c.b16 %v1106, %v1088
    %v1431 = vpack.c.b16 %v1107, %v1089
    %v1432 = vpack.c.b16 %v1108, %v1090
    %v1433 = vpack.c.b16 %v1109, %v1091
    %v1434 = vpack.c.b16 %v1110, %v1092
    %v1435 = vpack.c.b16 %v1111, %v1093
    %v1436 = vpack.c.b16 %v1112, %v1094
    %v1437 = vpack.c.b16 %v1113, %v1095
    %v1438 = vpack.c.b16 %v1114, %v1096
    %v1439 = vpack.c.b16 %v1115, %v1097
    %v1440 = vpack.c.b16 %v1116, %v1098
    %v1441 = vpack.c.b16 %v1117, %v1099
    %v1442 = vpack.c.b16 %v1136, %v1118
    %v1443 = vpack.c.b16 %v1137, %v1119
    %v1444 = vpack.c.b16 %v1138, %v1120
    %v1445 = vpack.c.b16 %v1139, %v1121
    %v1446 = vpack.c.b16 %v1140, %v1122
    %v1447 = vpack.c.b16 %v1141, %v1123
    %v1448 = vpack.c.b16 %v1142, %v1124
    %v1449 = vpack.c.b16 %v1143, %v1125
    %v1450 = vpack.c.b16 %v1144, %v1126
    %v1451 = vpack.c.b16 %v1145, %v1127
    %v1452 = vpack.c.b16 %v1146, %v1128
    %v1453 = vpack.c.b16 %v1147, %v1129
    %v1454 = vpack.c.b16 %v1148, %v1130
    %v1455 = vpack.c.b16 %v1149, %v1131
    %v1456 = vpack.c.b16 %v1150, %v1132
    %v1457 = vpack.c.b16 %v1151, %v1133
    %v1458 = vpack.c.b16 %v1152, %v1134
    %v1459 = vpack.c.b16 %v1153, %v1135
    %v1460 = vpack.c.b16 %v1172, %v1154
    %v1461 = vpack.c.b16 %v1173, %v1155
    %v1462 = vpack.c.b16 %v1174, %v1156
    %v1463 = vpack.c.b16 %v1175, %v1157
    %v1464 = vpack.c.b16 %v1176, %v1158
    %v1465 = vpack.c.b16 %v1177, %v1159
    %v1466 = vpack.c.b16 %v1178, %v1160
    %v1467 = vpack.c.b16 %v1179, %v1161
    %v1468 = vpack.c.b16 %v1180, %v1162
    %v1469 = vpack.c.b16 %v1181, %v1163
    %v1470 = vpack.c.b16 %v1182, %v1164
    %v1471 = vpack.c.b16 %v1183, %v1165
    %v1472 = vpack.c.b16 %v1184, %v1166
    %v1473 = vpack.c.b16 %v1185, %v1167
    %v1474 = vpack.c.b16 %v1186, %v1168
    %v1475 = vpack.c.b16 %v1187, %v1169
    %v1476 = vpack.c.b16 %v1188, %v1170
    %v1477 = vpack.c.b16 %v1189, %v1171
    %1766 = vmatprep.subr.bf16.mxu0 %v1191
    %1767 = vmatpush1.bf16.msra.mxu0 %v1190
    %1768 = vmatprep.subr.bf16.mxu0 %v1209
    %1769 = vmatpush1.bf16.msra.mxu0 %v1208
    %1770 = vmatprep.subr.bf16.mxu0 %v1227
    %1771 = vmatpush1.bf16.msra.mxu0 %v1226
    %1772 = vmatprep.subr.bf16.mxu0 %v1245
    %1773 = vmatpush1.bf16.msra.mxu0 %v1244
    %1774 = vmatprep.subr.bf16.mxu0 %v1263
    %1775 = vmatpush1.bf16.msra.mxu0 %v1262
    %1776 = vmatprep.subr.bf16.mxu0 %v1281
    %1777 = vmatpush1.bf16.msra.mxu0 %v1280
    %1778 = vmatprep.subr.bf16.mxu0 %v1299
    %1779 = vmatpush1.bf16.msra.mxu0 %v1298
    %1780 = vmatprep.subr.bf16.mxu0 %v1317
    %1781 = vmatpush1.bf16.msra.mxu0 %v1316
    %1782 = vmatprep.subr.bf16.mxu0 %v1335
    %1783 = vmatpush1.bf16.msra.mxu0 %v1334
    %1784 = vmatprep.subr.bf16.mxu0 %v1353
    %1785 = vmatpush1.bf16.msra.mxu0 %v1352
    %1786 = vmatprep.subr.bf16.mxu0 %v1371
    %1787 = vmatpush1.bf16.msra.mxu0 %v1370
    %1788 = vmatprep.subr.bf16.mxu0 %v1389
    %1789 = vmatpush1.bf16.msra.mxu0 %v1388
    %1790 = vmatprep.subr.bf16.mxu0 %v1407
    %1791 = vmatpush1.bf16.msra.mxu0 %v1406
    %1792 = vmatprep.subr.bf16.mxu0 %v1425
    %1793 = vmatpush1.bf16.msra.mxu0 %v1424
    %1794 = vmatprep.subr.bf16.mxu0 %v1443
    %1795 = vmatpush1.bf16.msra.mxu0 %v1442
    %1796 = vmatprep.subr.bf16.mxu0 %v1461
    %1797 = vmatpush1.bf16.msra.mxu0 %v1460
    %1798 = vmatprep.mubr.bf16.mxu0 %v37
    %1799 = vmatmul.mubr.bf16.gmra.mrb[0].mxu0 %v36
    %v1800 = vpop.f32.mrb[0].mxu0
    %v1801 = vadd.f32 0.0, %v1800
    %v1802 = vpop.f32.mrb[0].mxu0
    %v1803 = vadd.f32 0.0, %v1802
    %v1804 = vpop.f32.mrb[0].mxu0
    %v1805 = vpop.f32.mrb[0].mxu0
    %1806 = vdwg.mxu0
    %1807 = vmatprep.subr.bf16.mxu0 %v1193
    %1808 = vmatpush1.bf16.msra.mxu0 %v1192
    %1809 = vmatprep.subr.bf16.mxu0 %v1211
    %1810 = vmatpush1.bf16.msra.mxu0 %v1210
    %1811 = vmatprep.subr.bf16.mxu0 %v1229
    %1812 = vmatpush1.bf16.msra.mxu0 %v1228
    %1813 = vmatprep.subr.bf16.mxu0 %v1247
    %1814 = vmatpush1.bf16.msra.mxu0 %v1246
    %1815 = vmatprep.subr.bf16.mxu0 %v1265
    %1816 = vmatpush1.bf16.msra.mxu0 %v1264
    %1817 = vmatprep.subr.bf16.mxu0 %v1283
    %1818 = vmatpush1.bf16.msra.mxu0 %v1282
    %1819 = vmatprep.subr.bf16.mxu0 %v1301
    %1820 = vmatpush1.bf16.msra.mxu0 %v1300
    %1821 = vmatprep.subr.bf16.mxu0 %v1319
    %1822 = vmatpush1.bf16.msra.mxu0 %v1318
    %1823 = vmatprep.subr.bf16.mxu0 %v1337
    %1824 = vmatpush1.bf16.msra.mxu0 %v1336
    %1825 = vmatprep.subr.bf16.mxu0 %v1355
    %1826 = vmatpush1.bf16.msra.mxu0 %v1354
    %1827 = vmatprep.subr.bf16.mxu0 %v1373
    %1828 = vmatpush1.bf16.msra.mxu0 %v1372
    %1829 = vmatprep.subr.bf16.mxu0 %v1391
    %1830 = vmatpush1.bf16.msra.mxu0 %v1390
    %1831 = vmatprep.subr.bf16.mxu0 %v1409
    %1832 = vmatpush1.bf16.msra.mxu0 %v1408
    %1833 = vmatprep.subr.bf16.mxu0 %v1427
    %1834 = vmatpush1.bf16.msra.mxu0 %v1426
    %1835 = vmatprep.subr.bf16.mxu0 %v1445
    %1836 = vmatpush1.bf16.msra.mxu0 %v1444
    %1837 = vmatprep.subr.bf16.mxu0 %v1463
    %1838 = vmatpush1.bf16.msra.mxu0 %v1462
    %1839 = vmatprep.mubr.bf16.mxu0 %v37
    %1840 = vmatmul.mubr.bf16.gmra.mrb[0].mxu0 %v36
    %v1841 = vpop.f32.mrb[0].mxu0
    %v1842 = vadd.f32 0.0, %v1841
    %v1843 = vpop.f32.mrb[0].mxu0
    %v1844 = vadd.f32 0.0, %v1843
    %v1845 = vpop.f32.mrb[0].mxu0
    %v1846 = vpop.f32.mrb[0].mxu0
    %1847 = vdwg.mxu0
    %1848 = vmatprep.subr.bf16.mxu0 %v1195
    %1849 = vmatpush1.bf16.msra.mxu0 %v1194
    %1850 = vmatprep.subr.bf16.mxu0 %v1213
    %1851 = vmatpush1.bf16.msra.mxu0 %v1212
    %1852 = vmatprep.subr.bf16.mxu0 %v1231
    %1853 = vmatpush1.bf16.msra.mxu0 %v1230
    %1854 = vmatprep.subr.bf16.mxu0 %v1249
    %1855 = vmatpush1.bf16.msra.mxu0 %v1248
    %1856 = vmatprep.subr.bf16.mxu0 %v1267
    %1857 = vmatpush1.bf16.msra.mxu0 %v1266
    %1858 = vmatprep.subr.bf16.mxu0 %v1285
    %1859 = vmatpush1.bf16.msra.mxu0 %v1284
    %1860 = vmatprep.subr.bf16.mxu0 %v1303
    %1861 = vmatpush1.bf16.msra.mxu0 %v1302
    %1862 = vmatprep.subr.bf16.mxu0 %v1321
    %1863 = vmatpush1.bf16.msra.mxu0 %v1320
    %1864 = vmatprep.subr.bf16.mxu0 %v1339
    %1865 = vmatpush1.bf16.msra.mxu0 %v1338
    %1866 = vmatprep.subr.bf16.mxu0 %v1357
    %1867 = vmatpush1.bf16.msra.mxu0 %v1356
    %1868 = vmatprep.subr.bf16.mxu0 %v1375
    %1869 = vmatpush1.bf16.msra.mxu0 %v1374
    %1870 = vmatprep.subr.bf16.mxu0 %v1393
    %1871 = vmatpush1.bf16.msra.mxu0 %v1392
    %1872 = vmatprep.subr.bf16.mxu0 %v1411
    %1873 = vmatpush1.bf16.msra.mxu0 %v1410
    %1874 = vmatprep.subr.bf16.mxu0 %v1429
    %1875 = vmatpush1.bf16.msra.mxu0 %v1428
    %1876 = vmatprep.subr.bf16.mxu0 %v1447
    %1877 = vmatpush1.bf16.msra.mxu0 %v1446
    %1878 = vmatprep.subr.bf16.mxu0 %v1465
    %1879 = vmatpush1.bf16.msra.mxu0 %v1464
    %1880 = vmatprep.mubr.bf16.mxu0 %v37
    %1881 = vmatmul.mubr.bf16.gmra.mrb[0].mxu0 %v36
    %v1882 = vpop.f32.mrb[0].mxu0
    %v1883 = vadd.f32 0.0, %v1882
    %v1884 = vpop.f32.mrb[0].mxu0
    %v1885 = vadd.f32 0.0, %v1884
    %v1886 = vpop.f32.mrb[0].mxu0
    %v1887 = vpop.f32.mrb[0].mxu0
    %1888 = vdwg.mxu0
    %1889 = vmatprep.subr.bf16.mxu0 %v1197
    %1890 = vmatpush1.bf16.msra.mxu0 %v1196
    %1891 = vmatprep.subr.bf16.mxu0 %v1215
    %1892 = vmatpush1.bf16.msra.mxu0 %v1214
    %1893 = vmatprep.subr.bf16.mxu0 %v1233
    %1894 = vmatpush1.bf16.msra.mxu0 %v1232
    %1895 = vmatprep.subr.bf16.mxu0 %v1251
    %1896 = vmatpush1.bf16.msra.mxu0 %v1250
    %1897 = vmatprep.subr.bf16.mxu0 %v1269
    %1898 = vmatpush1.bf16.msra.mxu0 %v1268
    %1899 = vmatprep.subr.bf16.mxu0 %v1287
    %1900 = vmatpush1.bf16.msra.mxu0 %v1286
    %1901 = vmatprep.subr.bf16.mxu0 %v1305
    %1902 = vmatpush1.bf16.msra.mxu0 %v1304
    %1903 = vmatprep.subr.bf16.mxu0 %v1323
    %1904 = vmatpush1.bf16.msra.mxu0 %v1322
    %1905 = vmatprep.subr.bf16.mxu0 %v1341
    %1906 = vmatpush1.bf16.msra.mxu0 %v1340
    %1907 = vmatprep.subr.bf16.mxu0 %v1359
    %1908 = vmatpush1.bf16.msra.mxu0 %v1358
    %1909 = vmatprep.subr.bf16.mxu0 %v1377
    %1910 = vmatpush1.bf16.msra.mxu0 %v1376
    %1911 = vmatprep.subr.bf16.mxu0 %v1395
    %1912 = vmatpush1.bf16.msra.mxu0 %v1394
    %1913 = vmatprep.subr.bf16.mxu0 %v1413
    %1914 = vmatpush1.bf16.msra.mxu0 %v1412
    %1915 = vmatprep.subr.bf16.mxu0 %v1431
    %1916 = vmatpush1.bf16.msra.mxu0 %v1430
    %1917 = vmatprep.subr.bf16.mxu0 %v1449
    %1918 = vmatpush1.bf16.msra.mxu0 %v1448
    %1919 = vmatprep.subr.bf16.mxu0 %v1467
    %1920 = vmatpush1.bf16.msra.mxu0 %v1466
    %1921 = vmatprep.mubr.bf16.mxu0 %v37
    %1922 = vmatmul.mubr.bf16.gmra.mrb[0].mxu0 %v36
    %v1923 = vpop.f32.mrb[0].mxu0
    %v1924 = vadd.f32 0.0, %v1923
    %v1925 = vpop.f32.mrb[0].mxu0
    %v1926 = vadd.f32 0.0, %v1925
    %v1927 = vpop.f32.mrb[0].mxu0
    %v1928 = vpop.f32.mrb[0].mxu0
    %1929 = vdwg.mxu0
    %1930 = vmatprep.subr.bf16.mxu0 %v1199
    %1931 = vmatpush1.bf16.msra.mxu0 %v1198
    %1932 = vmatprep.subr.bf16.mxu0 %v1217
    %1933 = vmatpush1.bf16.msra.mxu0 %v1216
    %1934 = vmatprep.subr.bf16.mxu0 %v1235
    %1935 = vmatpush1.bf16.msra.mxu0 %v1234
    %1936 = vmatprep.subr.bf16.mxu0 %v1253
    %1937 = vmatpush1.bf16.msra.mxu0 %v1252
    %1938 = vmatprep.subr.bf16.mxu0 %v1271
    %1939 = vmatpush1.bf16.msra.mxu0 %v1270
    %1940 = vmatprep.subr.bf16.mxu0 %v1289
    %1941 = vmatpush1.bf16.msra.mxu0 %v1288
    %1942 = vmatprep.subr.bf16.mxu0 %v1307
    %1943 = vmatpush1.bf16.msra.mxu0 %v1306
    %1944 = vmatprep.subr.bf16.mxu0 %v1325
    %1945 = vmatpush1.bf16.msra.mxu0 %v1324
    %1946 = vmatprep.subr.bf16.mxu0 %v1343
    %1947 = vmatpush1.bf16.msra.mxu0 %v1342
    %1948 = vmatprep.subr.bf16.mxu0 %v1361
    %1949 = vmatpush1.bf16.msra.mxu0 %v1360
    %1950 = vmatprep.subr.bf16.mxu0 %v1379
    %1951 = vmatpush1.bf16.msra.mxu0 %v1378
    %1952 = vmatprep.subr.bf16.mxu0 %v1397
    %1953 = vmatpush1.bf16.msra.mxu0 %v1396
    %1954 = vmatprep.subr.bf16.mxu0 %v1415
    %1955 = vmatpush1.bf16.msra.mxu0 %v1414
    %1956 = vmatprep.subr.bf16.mxu0 %v1433
    %1957 = vmatpush1.bf16.msra.mxu0 %v1432
    %1958 = vmatprep.subr.bf16.mxu0 %v1451
    %1959 = vmatpush1.bf16.msra.mxu0 %v1450
    %1960 = vmatprep.subr.bf16.mxu0 %v1469
    %1961 = vmatpush1.bf16.msra.mxu0 %v1468
    %1962 = vmatprep.mubr.bf16.mxu0 %v37
    %1963 = vmatmul.mubr.bf16.gmra.mrb[0].mxu0 %v36
    %v1964 = vpop.f32.mrb[0].mxu0
    %v1965 = vadd.f32 0.0, %v1964
    %v1966 = vpop.f32.mrb[0].mxu0
    %v1967 = vadd.f32 0.0, %v1966
    %v1968 = vpop.f32.mrb[0].mxu0
    %v1969 = vpop.f32.mrb[0].mxu0
    %1970 = vdwg.mxu0
    %1971 = vmatprep.subr.bf16.mxu0 %v1201
    %1972 = vmatpush1.bf16.msra.mxu0 %v1200
    %1973 = vmatprep.subr.bf16.mxu0 %v1219
    %1974 = vmatpush1.bf16.msra.mxu0 %v1218
    %1975 = vmatprep.subr.bf16.mxu0 %v1237
    %1976 = vmatpush1.bf16.msra.mxu0 %v1236
    %1977 = vmatprep.subr.bf16.mxu0 %v1255
    %1978 = vmatpush1.bf16.msra.mxu0 %v1254
    %1979 = vmatprep.subr.bf16.mxu0 %v1273
    %1980 = vmatpush1.bf16.msra.mxu0 %v1272
    %1981 = vmatprep.subr.bf16.mxu0 %v1291
    %1982 = vmatpush1.bf16.msra.mxu0 %v1290
    %1983 = vmatprep.subr.bf16.mxu0 %v1309
    %1984 = vmatpush1.bf16.msra.mxu0 %v1308
    %1985 = vmatprep.subr.bf16.mxu0 %v1327
    %1986 = vmatpush1.bf16.msra.mxu0 %v1326
    %1987 = vmatprep.subr.bf16.mxu0 %v1345
    %1988 = vmatpush1.bf16.msra.mxu0 %v1344
    %1989 = vmatprep.subr.bf16.mxu0 %v1363
    %1990 = vmatpush1.bf16.msra.mxu0 %v1362
    %1991 = vmatprep.subr.bf16.mxu0 %v1381
    %1992 = vmatpush1.bf16.msra.mxu0 %v1380
    %1993 = vmatprep.subr.bf16.mxu0 %v1399
    %1994 = vmatpush1.bf16.msra.mxu0 %v1398
    %1995 = vmatprep.subr.bf16.mxu0 %v1417
    %1996 = vmatpush1.bf16.msra.mxu0 %v1416
    %1997 = vmatprep.subr.bf16.mxu0 %v1435
    %1998 = vmatpush1.bf16.msra.mxu0 %v1434
    %1999 = vmatprep.subr.bf16.mxu0 %v1453
    %2000 = vmatpush1.bf16.msra.mxu0 %v1452
    %2001 = vmatprep.subr.bf16.mxu0 %v1471
    %2002 = vmatpush1.bf16.msra.mxu0 %v1470
    %2003 = vmatprep.mubr.bf16.mxu0 %v37
    %2004 = vmatmul.mubr.bf16.gmra.mrb[0].mxu0 %v36
    %v2005 = vpop.f32.mrb[0].mxu0
    %v2006 = vadd.f32 0.0, %v2005
    %v2007 = vpop.f32.mrb[0].mxu0
    %v2008 = vadd.f32 0.0, %v2007
    %v2009 = vpop.f32.mrb[0].mxu0
    %v2010 = vpop.f32.mrb[0].mxu0
    %2011 = vdwg.mxu0
    %2012 = vmatprep.subr.bf16.mxu0 %v1203
    %2013 = vmatpush1.bf16.msra.mxu0 %v1202
    %2014 = vmatprep.subr.bf16.mxu0 %v1221
    %2015 = vmatpush1.bf16.msra.mxu0 %v1220
    %2016 = vmatprep.subr.bf16.mxu0 %v1239
    %2017 = vmatpush1.bf16.msra.mxu0 %v1238
    %2018 = vmatprep.subr.bf16.mxu0 %v1257
    %2019 = vmatpush1.bf16.msra.mxu0 %v1256
    %2020 = vmatprep.subr.bf16.mxu0 %v1275
    %2021 = vmatpush1.bf16.msra.mxu0 %v1274
    %2022 = vmatprep.subr.bf16.mxu0 %v1293
    %2023 = vmatpush1.bf16.msra.mxu0 %v1292
    %2024 = vmatprep.subr.bf16.mxu0 %v1311
    %2025 = vmatpush1.bf16.msra.mxu0 %v1310
    %2026 = vmatprep.subr.bf16.mxu0 %v1329
    %2027 = vmatpush1.bf16.msra.mxu0 %v1328
    %2028 = vmatprep.subr.bf16.mxu0 %v1347
    %2029 = vmatpush1.bf16.msra.mxu0 %v1346
    %2030 = vmatprep.subr.bf16.mxu0 %v1365
    %2031 = vmatpush1.bf16.msra.mxu0 %v1364
    %2032 = vmatprep.subr.bf16.mxu0 %v1383
    %2033 = vmatpush1.bf16.msra.mxu0 %v1382
    %2034 = vmatprep.subr.bf16.mxu0 %v1401
    %2035 = vmatpush1.bf16.msra.mxu0 %v1400
    %2036 = vmatprep.subr.bf16.mxu0 %v1419
    %2037 = vmatpush1.bf16.msra.mxu0 %v1418
    %2038 = vmatprep.subr.bf16.mxu0 %v1437
    %2039 = vmatpush1.bf16.msra.mxu0 %v1436
    %2040 = vmatprep.subr.bf16.mxu0 %v1455
    %2041 = vmatpush1.bf16.msra.mxu0 %v1454
    %2042 = vmatprep.subr.bf16.mxu0 %v1473
    %2043 = vmatpush1.bf16.msra.mxu0 %v1472
    %2044 = vmatprep.mubr.bf16.mxu0 %v37
    %2045 = vmatmul.mubr.bf16.gmra.mrb[0].mxu0 %v36
    %v2046 = vpop.f32.mrb[0].mxu0
    %v2047 = vadd.f32 0.0, %v2046
    %v2048 = vpop.f32.mrb[0].mxu0
    %v2049 = vadd.f32 0.0, %v2048
    %v2050 = vpop.f32.mrb[0].mxu0
    %v2051 = vpop.f32.mrb[0].mxu0
    %2052 = vdwg.mxu0
    %2053 = vmatprep.subr.bf16.mxu0 %v1205
    %2054 = vmatpush1.bf16.msra.mxu0 %v1204
    %2055 = vmatprep.subr.bf16.mxu0 %v1223
    %2056 = vmatpush1.bf16.msra.mxu0 %v1222
    %2057 = vmatprep.subr.bf16.mxu0 %v1241
    %2058 = vmatpush1.bf16.msra.mxu0 %v1240
    %2059 = vmatprep.subr.bf16.mxu0 %v1259
    %2060 = vmatpush1.bf16.msra.mxu0 %v1258
    %2061 = vmatprep.subr.bf16.mxu0 %v1277
    %2062 = vmatpush1.bf16.msra.mxu0 %v1276
    %2063 = vmatprep.subr.bf16.mxu0 %v1295
    %2064 = vmatpush1.bf16.msra.mxu0 %v1294
    %2065 = vmatprep.subr.bf16.mxu0 %v1313
    %2066 = vmatpush1.bf16.msra.mxu0 %v1312
    %2067 = vmatprep.subr.bf16.mxu0 %v1331
    %2068 = vmatpush1.bf16.msra.mxu0 %v1330
    %2069 = vmatprep.subr.bf16.mxu0 %v1349
    %2070 = vmatpush1.bf16.msra.mxu0 %v1348
    %2071 = vmatprep.subr.bf16.mxu0 %v1367
    %2072 = vmatpush1.bf16.msra.mxu0 %v1366
    %2073 = vmatprep.subr.bf16.mxu0 %v1385
    %2074 = vmatpush1.bf16.msra.mxu0 %v1384
    %2075 = vmatprep.subr.bf16.mxu0 %v1403
    %2076 = vmatpush1.bf16.msra.mxu0 %v1402
    %2077 = vmatprep.subr.bf16.mxu0 %v1421
    %2078 = vmatpush1.bf16.msra.mxu0 %v1420
    %2079 = vmatprep.subr.bf16.mxu0 %v1439
    %2080 = vmatpush1.bf16.msra.mxu0 %v1438
    %2081 = vmatprep.subr.bf16.mxu0 %v1457
    %2082 = vmatpush1.bf16.msra.mxu0 %v1456
    %2083 = vmatprep.subr.bf16.mxu0 %v1475
    %2084 = vmatpush1.bf16.msra.mxu0 %v1474
    %2085 = vmatprep.mubr.bf16.mxu0 %v37
    %2086 = vmatmul.mubr.bf16.gmra.mrb[0].mxu0 %v36
    %v2087 = vpop.f32.mrb[0].mxu0
    %v2088 = vadd.f32 0.0, %v2087
    %v2089 = vpop.f32.mrb[0].mxu0
    %v2090 = vadd.f32 0.0, %v2089
    %v2091 = vpop.f32.mrb[0].mxu0
    %v2092 = vpop.f32.mrb[0].mxu0
    %2093 = vdwg.mxu0
    %2094 = vmatprep.subr.bf16.mxu0 %v1207
    %2095 = vmatpush1.bf16.msra.mxu0 %v1206
    %2096 = vmatprep.subr.bf16.mxu0 %v1225
    %2097 = vmatpush1.bf16.msra.mxu0 %v1224
    %2098 = vmatprep.subr.bf16.mxu0 %v1243
    %2099 = vmatpush1.bf16.msra.mxu0 %v1242
    %2100 = vmatprep.subr.bf16.mxu0 %v1261
    %2101 = vmatpush1.bf16.msra.mxu0 %v1260
    %2102 = vmatprep.subr.bf16.mxu0 %v1279
    %2103 = vmatpush1.bf16.msra.mxu0 %v1278
    %2104 = vmatprep.subr.bf16.mxu0 %v1297
    %2105 = vmatpush1.bf16.msra.mxu0 %v1296
    %2106 = vmatprep.subr.bf16.mxu0 %v1315
    %2107 = vmatpush1.bf16.msra.mxu0 %v1314
    %2108 = vmatprep.subr.bf16.mxu0 %v1333
    %2109 = vmatpush1.bf16.msra.mxu0 %v1332
    %2110 = vmatprep.subr.bf16.mxu0 %v1351
    %2111 = vmatpush1.bf16.msra.mxu0 %v1350
    %2112 = vmatprep.subr.bf16.mxu0 %v1369
    %2113 = vmatpush1.bf16.msra.mxu0 %v1368
    %2114 = vmatprep.subr.bf16.mxu0 %v1387
    %2115 = vmatpush1.bf16.msra.mxu0 %v1386
    %2116 = vmatprep.subr.bf16.mxu0 %v1405
    %2117 = vmatpush1.bf16.msra.mxu0 %v1404
    %2118 = vmatprep.subr.bf16.mxu0 %v1423
    %2119 = vmatpush1.bf16.msra.mxu0 %v1422
    %2120 = vmatprep.subr.bf16.mxu0 %v1441
    %2121 = vmatpush1.bf16.msra.mxu0 %v1440
    %2122 = vmatprep.subr.bf16.mxu0 %v1459
    %2123 = vmatpush1.bf16.msra.mxu0 %v1458
    %2124 = vmatprep.subr.bf16.mxu0 %v1477
    %2125 = vmatpush1.bf16.msra.mxu0 %v1476
    %2126 = vmatprep.mubr.bf16.mxu0 %v37
    %2127 = vmatmul.mubr.bf16.gmra.mrb[0].mxu0 %v36
    %v2128 = vpop.f32.mrb[0].mxu0
    %v2129 = vadd.f32 0.0, %v2128
    %v2130 = vpop.f32.mrb[0].mxu0
    %v2131 = vadd.f32 0.0, %v2130
    %v2132 = vpop.f32.mrb[0].mxu0
    %v2133 = vpop.f32.mrb[0].mxu0
    %2134 = vdwg.mxu0
    %v2135 = vmul.f32 %v1801, %v34
    %v2136 = vmul.f32 %v1803, %v35
    %v2137 = vadd.f32 %v2135, %v2136
    %2138 = vadd.xlane.f32.xlu0 %v2137
    %v2139 = vpop.xlane.xlu0 %2138
    %v2140 = vmul.f32 %v1842, %v34
    %v2141 = vmul.f32 %v1844, %v35
    %v2142 = vadd.f32 %v2140, %v2141
    %2143 = vadd.xlane.f32.xlu0 %v2142
    %v2144 = vpop.xlane.xlu0 %2143
    %v2145 = vmul.f32 %v1883, %v34
    %v2146 = vmul.f32 %v1885, %v35
    %v2147 = vadd.f32 %v2145, %v2146
    %2148 = vadd.xlane.f32.xlu0 %v2147
    %v2149 = vpop.xlane.xlu0 %2148
    %v2150 = vmul.f32 %v1924, %v34
    %v2151 = vmul.f32 %v1926, %v35
    %v2152 = vadd.f32 %v2150, %v2151
    %2153 = vadd.xlane.f32.xlu0 %v2152
    %v2154 = vpop.xlane.xlu0 %2153
    %v2155 = vmul.f32 %v1965, %v34
    %v2156 = vmul.f32 %v1967, %v35
    %v2157 = vadd.f32 %v2155, %v2156
    %2158 = vadd.xlane.f32.xlu0 %v2157
    %v2159 = vpop.xlane.xlu0 %2158
    %v2160 = vmul.f32 %v2006, %v34
    %v2161 = vmul.f32 %v2008, %v35
    %v2162 = vadd.f32 %v2160, %v2161
    %2163 = vadd.xlane.f32.xlu0 %v2162
    %v2164 = vpop.xlane.xlu0 %2163
    %v2165 = vmul.f32 %v2047, %v34
    %v2166 = vmul.f32 %v2049, %v35
    %v2167 = vadd.f32 %v2165, %v2166
    %2168 = vadd.xlane.f32.xlu0 %v2167
    %v2169 = vpop.xlane.xlu0 %2168
    %v2170 = vmul.f32 %v2088, %v34
    %v2171 = vmul.f32 %v2090, %v35
    %v2172 = vadd.f32 %v2170, %v2171
    %2173 = vadd.xlane.f32.xlu0 %v2172
    %v2174 = vpop.xlane.xlu0 %2173
    %v2175 = vmul.f32 %v2129, %v34
    %v2176 = vmul.f32 %v2131, %v35
    %v2177 = vadd.f32 %v2175, %v2176
    %2178 = vadd.xlane.f32.xlu0 %v2177
    %v2179 = vpop.xlane.xlu0 %2178
    %vm2180 = vcmask 7168
    %v2181 = vsel %vm2180, %v2139, %v2144
    %vm2182 = vcmask 15360
    %v2183 = vsel %vm2182, %v2181, %v2149
    %vm2184 = vcmask 23552
    %v2185 = vsel %vm2184, %v2183, %v2154
    %vm2186 = vcmask 31744
    %v2187 = vsel %vm2186, %v2185, %v2159
    %vm2188 = vcmask 39936
    %v2189 = vsel %vm2188, %v2187, %v2164
    %vm2190 = vcmask 48128
    %v2191 = vsel %vm2190, %v2189, %v2169
    %vm2192 = vcmask 56320
    %v2193 = vsel %vm2192, %v2191, %v2174
    %vm2194 = vcmask 64512
    %v2195 = vsel %vm2194, %v2193, %v2179
    %vm2196 = vcmask 72704
    %2197 = vst.msk [vmem:[#allocation5] sm:$0xff] %vm2196, %v2195
    // Predicated region
    $region14: #{qsvdd_forward.1} parent=1 // pred_check
      _
    $region15: #{qsvdd_forward.1} parent=1 // pred_check_branch
      %2199 = sbr.rel (0) target = $region17
    $region16: #{qsvdd_forward.1} parent=1 // pred_region
      %s2201 = ssub.s32 128, 128
      %2202 = vsyncadd [#allocation4], %s2201
      %s2204 = sshll.u32 [#allocation5], 4
      %s2205 = int_to_ptr.vmem [resolvable:$true] %s2204
      %2207 = dma.vmem_to_hbm [thread:$0]  %s2205, 128, %s2, [#allocation4]
    $region17: #{qsvdd_forward.1} parent=1 // pred_fallthru
      _
    // Predicated region
    $region18: #{qsvdd_forward.1} parent=1 // pred_check
      _
    $region19: #{qsvdd_forward.1} parent=1 // pred_check_branch
      %2209 = sbr.rel (0) target = $region21
    $region20: #{qsvdd_forward.1} parent=1 // pred_region
      %2210 = dma.done [#allocation4], 128
    $region21: #{qsvdd_forward.1} parent=1 // pred_fallthru
      _
    %2211 = vsyncpa [#allocation3], 1
    %2212 = vsyncpa [#allocation4], 1

</llo_original>
